<compile_context>
chip_gen: v6e
topology: v6e:2x2x1
jax: 0.10.0
libtpu: 0.0.40
codegen_flags: <defaults>
</compile_context>

<pallas_src>
import jax
import jax.numpy as jnp
import numpy as np
from jax.experimental import pallas as pl
from jax.experimental.pallas import tpu as pltpu


# ----------------------------------------------------------------------------
# Fused Pallas kernel
# ----------------------------------------------------------------------------
def _make_attention_kernel(tp, K, C, n_layers):
    """tp: points per grid step, K: n_near, C: channel, n_layers: per-MLP."""
    M = K * tp                 # rows per grid step (n_near-major ordering)
    n_per_mlp = 2 * n_layers   # (W, b) per layer

    def kernel(xi_ref, xj_ref, *rest):
        out_ref = rest[-1]          # (1, tp, C)
        params = rest[:-1]          # fai | fused psi+alpha | gamma, (W, b) each

        def mlp(x, which):
            base = which * n_per_mlp
            for l in range(n_layers):
                w = params[base + 2 * l][...]        # [C_in, C_out] (BN folded)
                b = params[base + 2 * l + 1][...]    # [1, C_out]
                x = jnp.dot(x, w, preferred_element_type=jnp.float32) + b
                x = jnp.maximum(x, 0.0)              # ReLU
            return x

        # (K, tp, C) -> (K*tp, C): layout-preserving collapse of major dims.
        xi = xi_ref[0].reshape(M, C)
        xj = xj_ref[0].reshape(M, C)

        fai = mlp(xi, 0)            # [M, C]
        pa = mlp(xj, 1)             # [M, 2C]  fused psi | alpha (alpha pre-scaled by C/K)
        psi = pa[:, :C]
        alpha = pa[:, C:]
        g = mlp(fai - psi, 2)       # [M, C]

        # softmax over the channel axis (lanes)
        m = jnp.max(g, axis=-1, keepdims=True)
        e = jnp.exp(g - m)
        sm = e / jnp.sum(e, axis=-1, keepdims=True)

        y = sm * alpha              # [M, C]; (channel / n_near) already folded in

        # sum over n_near: rows are k*tp + p, so per-k blocks are contiguous,
        # sublane-aligned static slices — no reshape / relayout.
        acc = y[0:tp]
        for k in range(1, K):
            acc = acc + y[k * tp:(k + 1) * tp]

        out_ref[0] = acc

    return kernel


# ----------------------------------------------------------------------------
# Host-side parameter fusion helpers
# ----------------------------------------------------------------------------
def _fuse_psi_alpha(psi_p, alpha_p, out_scale):
    """Fuse two same-depth MLPs sharing an input into one wider MLP.

    Layer 0: concat along output axis. Deeper layers: block-diagonal weights.
    `out_scale` (the module's channel / n_near factor) is folded into alpha's
    last layer — exact because every layer ends in ReLU (positive-homogeneous).
    """
    fused = []
    n = len(psi_p)
    for l, ((wp, bp), (wa, ba)) in enumerate(zip(psi_p, alpha_p)):
        if l == n - 1:
            wa = wa * out_scale
            ba = ba * out_scale
        if l == 0:
            w = jnp.concatenate([wp, wa], axis=1)
        else:
            top = jnp.concatenate(
                [wp, jnp.zeros((wp.shape[0], wa.shape[1]), wp.dtype)], axis=1)
            bot = jnp.concatenate(
                [jnp.zeros((wa.shape[0], wp.shape[1]), wa.dtype), wa], axis=1)
            w = jnp.concatenate([top, bot], axis=0)
        b = jnp.concatenate([bp, ba], axis=1)
        fused.append((w, b))
    return fused


def _pick_point_tile(P, cap=256):
    """Largest divisor of P <= cap, preferring multiples of 8 (sublane align)."""
    divs = [t for t in range(1, min(P, cap) + 1) if P % t == 0]
    mult8 = [t for t in divs if t % 8 == 0]
    return (mult8 or divs)[-1]


# ----------------------------------------------------------------------------
# Wrapper
# ----------------------------------------------------------------------------
def attention_in_pnts(x_i, x_j, fai_p, psi_p, alpha_p, gamma_p):
    """
    x_i, x_j : [B, C, n_near, n_point]  (torch NCHW layout)
    *_p      : list of (W [C_in, C_out], b [1, C_out]) per layer, BN folded
    returns  : [B, n_point, C]          (== torch output after permute(0,2,1))
    """
    B, C, K, P = x_j.shape
    n_layers = len(fai_p)
    tp = _pick_point_tile(P)
    n_pt = P // tp

    # host-side fusions (see helpers above)
    pa_p = _fuse_psi_alpha(psi_p, alpha_p, out_scale=float(C) / float(K))

    # layout plumbing only: [B, C, K, P] -> [B, K, P, C] (channel-last, K-major)
    def to_kernel_layout(x):
        return jnp.transpose(x, (0, 2, 3, 1)).astype(jnp.float32)

    xi_t = to_kernel_layout(x_i)
    xj_t = to_kernel_layout(x_j)

    flat_params = []
    for mlp_params in (fai_p, pa_p, gamma_p):
        for (w, b) in mlp_params:
            flat_params += [w.astype(jnp.float32), b.astype(jnp.float32)]

    in_specs = [
        pl.BlockSpec((1, K, tp, C), lambda b, j: (b, 0, j, 0)),
        pl.BlockSpec((1, K, tp, C), lambda b, j: (b, 0, j, 0)),
    ]
    for p in flat_params:
        in_specs.append(pl.BlockSpec(p.shape, lambda b, j: (0, 0)))  # grid-invariant

    out = pl.pallas_call(
        _make_attention_kernel(tp, K, C, n_layers),
        grid=(B, n_pt),
        in_specs=in_specs,
        out_specs=pl.BlockSpec((1, tp, C), lambda b, j: (b, j, 0)),
        out_shape=jax.ShapeDtypeStruct((B, P, C), jnp.float32),
        compiler_params=pltpu.CompilerParams(
            dimension_semantics=("parallel", "parallel")),
    )(xi_t, xj_t, *flat_params)
    return out


# ----------------------------------------------------------------------------
# Deterministic params: Conv2d(1x1) + eval-mode BatchNorm2d folded to (W', b')
# ----------------------------------------------------------------------------
def make_mlp_params(key, dims):
    eps = 1e-5
    layers = []
    last = dims[0]
    for out_c in dims[1:]:
        key, kw, kb, kg, kbe, km, kv = jax.random.split(key, 7)
        w = jax.random.normal(kw, (last, out_c), jnp.float32) / np.sqrt(last)
        conv_b = 0.1 * jax.random.normal(kb, (out_c,), jnp.float32)
        gamma = 1.0 + 0.1 * jax.random.normal(kg, (out_c,), jnp.float32)
        beta = 0.1 * jax.random.normal(kbe, (out_c,), jnp.float32)
        run_mean = 0.1 * jax.random.normal(km, (out_c,), jnp.float32)
        run_var = 1.0 + 0.1 * jax.random.uniform(kv, (out_c,), jnp.float32)
        scale = gamma / jnp.sqrt(run_var + eps)
        w_folded = w * scale[None, :]                  # fold BN scale into weights
        b_folded = (conv_b - run_mean) * scale + beta  # fold conv bias + BN shift
        layers.append((w_folded, b_folded.reshape(1, -1)))
        last = out_c
    return layers


# ----------------------------------------------------------------------------
# Pure-JAX reference mirroring the torch forward on NCHW (unfused params)
# ----------------------------------------------------------------------------
def reference(x_i, x_j, fai_p, psi_p, alpha_p, gamma_p):
    B, C, K, P = x_j.shape

    def mlp(x, layers):                               # x: [B, C, K, P]
        for (w, b) in layers:
            x = jnp.einsum('bckp,cd->bdkp', x, w) + b.reshape(1, -1, 1, 1)
            x = jnp.maximum(x, 0.0)
        return x

    fai_xi = mlp(x_i, fai_p)
    psi_xj = mlp(x_j, psi_p)
    alpha_xj = mlp(x_j, alpha_p)
    g = mlp(fai_xi - psi_xj, gamma_p)
    y = C * jax.nn.softmax(g, axis=1) * alpha_xj      # [B, C, K, P]
    y = jnp.sum(y, axis=2) / K                        # [B, C, P]
    return jnp.transpose(y, (0, 2, 1))                # [B, P, C]


if __name__ == "__main__":
    key = jax.random.PRNGKey(0)
    B, C, K, P = 2, 32, 4, 16     # batch, channel_in, n_near, n_point

    kx, ky, kf, kps, ka, kg = jax.random.split(key, 6)
    x_i = jax.random.normal(kx, (B, C, K, P), jnp.float32)
    x_j = jax.random.normal(ky, (B, C, K, P), jnp.float32)

    dims = [C, C + 8, C]          # full_connected_conv2d([C, C+8, C])
    fai_p = make_mlp_params(kf, dims)
    psi_p = make_mlp_params(kps, dims)
    alpha_p = make_mlp_params(ka, dims)
    gamma_p = make_mlp_params(kg, dims)

    y = attention_in_pnts(x_i, x_j, fai_p, psi_p, alpha_p, gamma_p)
    y = jax.block_until_ready(y)

    ref = reference(x_i, x_j, fai_p, psi_p, alpha_p, gamma_p)
    np.testing.assert_allclose(np.asarray(y), np.asarray(ref),
                               rtol=1e-4, atol=1e-4)
    assert y.shape == (B, P, C)
    print("KERNEL_OK")
</pallas_src>

<mosaic_0001>
module attributes {stable_mosaic.version = 11 : i64} {
  func.func @kernel(%arg0: i32, %arg1: i32, %arg2: memref<1x4x16x32xf32, #tpu.memory_space<vmem>>, %arg3: memref<1x4x16x32xf32, #tpu.memory_space<vmem>>, %arg4: memref<32x40xf32, #tpu.memory_space<vmem>>, %arg5: memref<1x40xf32, #tpu.memory_space<vmem>>, %arg6: memref<40x32xf32, #tpu.memory_space<vmem>>, %arg7: memref<1x32xf32, #tpu.memory_space<vmem>>, %arg8: memref<32x80xf32, #tpu.memory_space<vmem>>, %arg9: memref<1x80xf32, #tpu.memory_space<vmem>>, %arg10: memref<80x64xf32, #tpu.memory_space<vmem>>, %arg11: memref<1x64xf32, #tpu.memory_space<vmem>>, %arg12: memref<32x40xf32, #tpu.memory_space<vmem>>, %arg13: memref<1x40xf32, #tpu.memory_space<vmem>>, %arg14: memref<40x32xf32, #tpu.memory_space<vmem>>, %arg15: memref<1x32xf32, #tpu.memory_space<vmem>>, %arg16: memref<1x16x32xf32, #tpu.memory_space<vmem>>) attributes {dimension_semantics = [#tpu.dimension_semantics<parallel>, #tpu.dimension_semantics<parallel>], iteration_bounds = array<i64: 2, 1>, scalar_prefetch = 0 : i64, scratch_operands = 0 : i64, tpu.core_type = #tpu.core_type<tc>, window_params = [{transform_indices = @transform_0, window_bounds = array<i64: 1, 4, 16, 32>}, {transform_indices = @transform_1, window_bounds = array<i64: 1, 4, 16, 32>}, {pipeline_mode = #tpu.pipeline_mode<synchronous>, transform_indices = @transform_2, window_bounds = array<i64: 32, 40>}, {pipeline_mode = #tpu.pipeline_mode<synchronous>, transform_indices = @transform_3, window_bounds = array<i64: 1, 40>}, {pipeline_mode = #tpu.pipeline_mode<synchronous>, transform_indices = @transform_4, window_bounds = array<i64: 40, 32>}, {pipeline_mode = #tpu.pipeline_mode<synchronous>, transform_indices = @transform_5, window_bounds = array<i64: 1, 32>}, {pipeline_mode = #tpu.pipeline_mode<synchronous>, transform_indices = @transform_6, window_bounds = array<i64: 32, 80>}, {pipeline_mode = #tpu.pipeline_mode<synchronous>, transform_indices = @transform_7, window_bounds = array<i64: 1, 80>}, {pipeline_mode = #tpu.pipeline_mode<synchronous>, transform_indices = @transform_8, window_bounds = array<i64: 80, 64>}, {pipeline_mode = #tpu.pipeline_mode<synchronous>, transform_indices = @transform_9, window_bounds = array<i64: 1, 64>}, {pipeline_mode = #tpu.pipeline_mode<synchronous>, transform_indices = @transform_10, window_bounds = array<i64: 32, 40>}, {pipeline_mode = #tpu.pipeline_mode<synchronous>, transform_indices = @transform_11, window_bounds = array<i64: 1, 40>}, {pipeline_mode = #tpu.pipeline_mode<synchronous>, transform_indices = @transform_12, window_bounds = array<i64: 40, 32>}, {pipeline_mode = #tpu.pipeline_mode<synchronous>, transform_indices = @transform_13, window_bounds = array<i64: 1, 32>}, {transform_indices = @transform_14, window_bounds = array<i64: 1, 16, 32>}]} {
    %c0 = arith.constant 0 : index
    %c0_0 = arith.constant 0 : index
    %c0_1 = arith.constant 0 : index
    %c0_2 = arith.constant 0 : index
    %0 = vector.load %arg2[%c0, %c0_0, %c0_1, %c0_2] : memref<1x4x16x32xf32, #tpu.memory_space<vmem>>, vector<1x4x16x32xf32>
    %1 = vector.shape_cast %0 : vector<1x4x16x32xf32> to vector<4x16x32xf32>
    %2 = vector.shape_cast %1 : vector<4x16x32xf32> to vector<64x32xf32>
    %c0_3 = arith.constant 0 : index
    %c0_4 = arith.constant 0 : index
    %c0_5 = arith.constant 0 : index
    %c0_6 = arith.constant 0 : index
    %3 = vector.load %arg3[%c0_3, %c0_4, %c0_5, %c0_6] : memref<1x4x16x32xf32, #tpu.memory_space<vmem>>, vector<1x4x16x32xf32>
    %4 = vector.shape_cast %3 : vector<1x4x16x32xf32> to vector<4x16x32xf32>
    %5 = vector.shape_cast %4 : vector<4x16x32xf32> to vector<64x32xf32>
    %c0_7 = arith.constant 0 : index
    %c0_8 = arith.constant 0 : index
    %6 = vector.load %arg4[%c0_7, %c0_8] : memref<32x40xf32, #tpu.memory_space<vmem>>, vector<32x40xf32>
    %c0_9 = arith.constant 0 : index
    %c0_10 = arith.constant 0 : index
    %7 = vector.load %arg5[%c0_9, %c0_10] : memref<1x40xf32, #tpu.memory_space<vmem>>, vector<1x40xf32>
    %cst = arith.constant dense<0.000000e+00> : vector<64x40xf32>
    %8 = tpu.matmul %2, %6, %cst {dimension_numbers = #tpu.dot_dimension_numbers<[1], [0], [0], [1], [0, 0, 1, 1], [], []>} : vector<64x32xf32>, vector<32x40xf32>, vector<64x40xf32> -> vector<64x40xf32>
    %9 = vector.broadcast %7 : vector<1x40xf32> to vector<64x40xf32>
    %10 = arith.addf %8, %9 : vector<64x40xf32>
    %cst_11 = arith.constant 0.000000e+00 : f32
    %11 = vector.broadcast %cst_11 : f32 to vector<64x40xf32>
    %12 = arith.maximumf %10, %11 : vector<64x40xf32>
    %c0_12 = arith.constant 0 : index
    %c0_13 = arith.constant 0 : index
    %13 = vector.load %arg6[%c0_12, %c0_13] : memref<40x32xf32, #tpu.memory_space<vmem>>, vector<40x32xf32>
    %c0_14 = arith.constant 0 : index
    %c0_15 = arith.constant 0 : index
    %14 = vector.load %arg7[%c0_14, %c0_15] : memref<1x32xf32, #tpu.memory_space<vmem>>, vector<1x32xf32>
    %cst_16 = arith.constant dense<0.000000e+00> : vector<64x32xf32>
    %15 = tpu.matmul %12, %13, %cst_16 {dimension_numbers = #tpu.dot_dimension_numbers<[1], [0], [0], [1], [0, 0, 1, 1], [], []>} : vector<64x40xf32>, vector<40x32xf32>, vector<64x32xf32> -> vector<64x32xf32>
    %16 = vector.broadcast %14 : vector<1x32xf32> to vector<64x32xf32>
    %17 = arith.addf %15, %16 : vector<64x32xf32>
    %cst_17 = arith.constant 0.000000e+00 : f32
    %18 = vector.broadcast %cst_17 : f32 to vector<64x32xf32>
    %19 = arith.maximumf %17, %18 : vector<64x32xf32>
    %c0_18 = arith.constant 0 : index
    %c0_19 = arith.constant 0 : index
    %20 = vector.load %arg8[%c0_18, %c0_19] : memref<32x80xf32, #tpu.memory_space<vmem>>, vector<32x80xf32>
    %c0_20 = arith.constant 0 : index
    %c0_21 = arith.constant 0 : index
    %21 = vector.load %arg9[%c0_20, %c0_21] : memref<1x80xf32, #tpu.memory_space<vmem>>, vector<1x80xf32>
    %cst_22 = arith.constant dense<0.000000e+00> : vector<64x80xf32>
    %22 = tpu.matmul %5, %20, %cst_22 {dimension_numbers = #tpu.dot_dimension_numbers<[1], [0], [0], [1], [0, 0, 1, 1], [], []>} : vector<64x32xf32>, vector<32x80xf32>, vector<64x80xf32> -> vector<64x80xf32>
    %23 = vector.broadcast %21 : vector<1x80xf32> to vector<64x80xf32>
    %24 = arith.addf %22, %23 : vector<64x80xf32>
    %cst_23 = arith.constant 0.000000e+00 : f32
    %25 = vector.broadcast %cst_23 : f32 to vector<64x80xf32>
    %26 = arith.maximumf %24, %25 : vector<64x80xf32>
    %c0_24 = arith.constant 0 : index
    %c0_25 = arith.constant 0 : index
    %27 = vector.load %arg10[%c0_24, %c0_25] : memref<80x64xf32, #tpu.memory_space<vmem>>, vector<80x64xf32>
    %c0_26 = arith.constant 0 : index
    %c0_27 = arith.constant 0 : index
    %28 = vector.load %arg11[%c0_26, %c0_27] : memref<1x64xf32, #tpu.memory_space<vmem>>, vector<1x64xf32>
    %cst_28 = arith.constant dense<0.000000e+00> : vector<64x64xf32>
    %29 = tpu.matmul %26, %27, %cst_28 {dimension_numbers = #tpu.dot_dimension_numbers<[1], [0], [0], [1], [0, 0, 1, 1], [], []>} : vector<64x80xf32>, vector<80x64xf32>, vector<64x64xf32> -> vector<64x64xf32>
    %30 = vector.broadcast %28 : vector<1x64xf32> to vector<64x64xf32>
    %31 = arith.addf %29, %30 : vector<64x64xf32>
    %cst_29 = arith.constant 0.000000e+00 : f32
    %32 = vector.broadcast %cst_29 : f32 to vector<64x64xf32>
    %33 = arith.maximumf %31, %32 : vector<64x64xf32>
    %34 = vector.extract_strided_slice %33 {offsets = [0, 0], sizes = [64, 32], strides = [1, 1]} : vector<64x64xf32> to vector<64x32xf32>
    %35 = vector.extract_strided_slice %33 {offsets = [0, 32], sizes = [64, 32], strides = [1, 1]} : vector<64x64xf32> to vector<64x32xf32>
    %36 = arith.subf %19, %34 : vector<64x32xf32>
    %c0_30 = arith.constant 0 : index
    %c0_31 = arith.constant 0 : index
    %37 = vector.load %arg12[%c0_30, %c0_31] : memref<32x40xf32, #tpu.memory_space<vmem>>, vector<32x40xf32>
    %c0_32 = arith.constant 0 : index
    %c0_33 = arith.constant 0 : index
    %38 = vector.load %arg13[%c0_32, %c0_33] : memref<1x40xf32, #tpu.memory_space<vmem>>, vector<1x40xf32>
    %cst_34 = arith.constant dense<0.000000e+00> : vector<64x40xf32>
    %39 = tpu.matmul %36, %37, %cst_34 {dimension_numbers = #tpu.dot_dimension_numbers<[1], [0], [0], [1], [0, 0, 1, 1], [], []>} : vector<64x32xf32>, vector<32x40xf32>, vector<64x40xf32> -> vector<64x40xf32>
    %40 = vector.broadcast %38 : vector<1x40xf32> to vector<64x40xf32>
    %41 = arith.addf %39, %40 : vector<64x40xf32>
    %cst_35 = arith.constant 0.000000e+00 : f32
    %42 = vector.broadcast %cst_35 : f32 to vector<64x40xf32>
    %43 = arith.maximumf %41, %42 : vector<64x40xf32>
    %c0_36 = arith.constant 0 : index
    %c0_37 = arith.constant 0 : index
    %44 = vector.load %arg14[%c0_36, %c0_37] : memref<40x32xf32, #tpu.memory_space<vmem>>, vector<40x32xf32>
    %c0_38 = arith.constant 0 : index
    %c0_39 = arith.constant 0 : index
    %45 = vector.load %arg15[%c0_38, %c0_39] : memref<1x32xf32, #tpu.memory_space<vmem>>, vector<1x32xf32>
    %cst_40 = arith.constant dense<0.000000e+00> : vector<64x32xf32>
    %46 = tpu.matmul %43, %44, %cst_40 {dimension_numbers = #tpu.dot_dimension_numbers<[1], [0], [0], [1], [0, 0, 1, 1], [], []>} : vector<64x40xf32>, vector<40x32xf32>, vector<64x32xf32> -> vector<64x32xf32>
    %47 = vector.broadcast %45 : vector<1x32xf32> to vector<64x32xf32>
    %48 = arith.addf %46, %47 : vector<64x32xf32>
    %cst_41 = arith.constant 0.000000e+00 : f32
    %49 = vector.broadcast %cst_41 : f32 to vector<64x32xf32>
    %50 = arith.maximumf %48, %49 : vector<64x32xf32>
    %cst_42 = arith.constant dense<0xFF800000> : vector<64xf32>
    %51 = vector.multi_reduction <maximumf>, %50, %cst_42 [1] : vector<64x32xf32> to vector<64xf32>
    %52 = vector.shape_cast %51 : vector<64xf32> to vector<64x1xf32>
    %53 = vector.broadcast %52 : vector<64x1xf32> to vector<64x32xf32>
    %54 = arith.subf %50, %53 : vector<64x32xf32>
    %55 = math.exp %54 : vector<64x32xf32>
    %cst_43 = arith.constant dense<0.000000e+00> : vector<64xf32>
    %56 = vector.multi_reduction <add>, %55, %cst_43 [1] : vector<64x32xf32> to vector<64xf32>
    %57 = vector.shape_cast %56 : vector<64xf32> to vector<64x1xf32>
    %58 = vector.broadcast %57 : vector<64x1xf32> to vector<64x32xf32>
    %59 = arith.divf %55, %58 : vector<64x32xf32>
    %60 = arith.mulf %59, %35 : vector<64x32xf32>
    %61 = vector.extract_strided_slice %60 {offsets = [0, 0], sizes = [16, 32], strides = [1, 1]} : vector<64x32xf32> to vector<16x32xf32>
    %62 = vector.extract_strided_slice %60 {offsets = [16, 0], sizes = [16, 32], strides = [1, 1]} : vector<64x32xf32> to vector<16x32xf32>
    %63 = arith.addf %61, %62 : vector<16x32xf32>
    %64 = vector.extract_strided_slice %60 {offsets = [32, 0], sizes = [16, 32], strides = [1, 1]} : vector<64x32xf32> to vector<16x32xf32>
    %65 = arith.addf %63, %64 : vector<16x32xf32>
    %66 = vector.extract_strided_slice %60 {offsets = [48, 0], sizes = [16, 32], strides = [1, 1]} : vector<64x32xf32> to vector<16x32xf32>
    %67 = arith.addf %65, %66 : vector<16x32xf32>
    %c0_44 = arith.constant 0 : index
    %c0_45 = arith.constant 0 : index
    %c0_46 = arith.constant 0 : index
    %68 = vector.load %arg16[%c0_44, %c0_45, %c0_46] : memref<1x16x32xf32, #tpu.memory_space<vmem>>, vector<1x16x32xf32>
    %69 = vector.shape_cast %68 : vector<1x16x32xf32> to vector<16x32xf32>
    %70 = vector.shape_cast %67 : vector<16x32xf32> to vector<1x16x32xf32>
    tpu.vector_store %arg16[%c0_44, %c0_45, %c0_46], %70 {strides = array<i32>} : memref<1x16x32xf32, #tpu.memory_space<vmem>>, vector<1x16x32xf32>,
    return
  }
  func.func @transform_0(%arg0: i32, %arg1: i32) -> (i32, i32, i32, i32) {
    %c0_i32 = arith.constant 0 : i32
    %c0_i32_0 = arith.constant 0 : i32
    %c0_i32_1 = arith.constant 0 : i32
    return %arg0, %c0_i32, %arg1, %c0_i32_0 : i32, i32, i32, i32
  }
  func.func @transform_1(%arg0: i32, %arg1: i32) -> (i32, i32, i32, i32) {
    %c0_i32 = arith.constant 0 : i32
    %c0_i32_0 = arith.constant 0 : i32
    %c0_i32_1 = arith.constant 0 : i32
    return %arg0, %c0_i32, %arg1, %c0_i32_0 : i32, i32, i32, i32
  }
  func.func @transform_2(%arg0: i32, %arg1: i32) -> (i32, i32) {
    %c0_i32 = arith.constant 0 : i32
    %c0_i32_0 = arith.constant 0 : i32
    %c0_i32_1 = arith.constant 0 : i32
    return %c0_i32, %c0_i32_0 : i32, i32
  }
  func.func @transform_3(%arg0: i32, %arg1: i32) -> (i32, i32) {
    %c0_i32 = arith.constant 0 : i32
    %c0_i32_0 = arith.constant 0 : i32
    %c0_i32_1 = arith.constant 0 : i32
    return %c0_i32, %c0_i32_0 : i32, i32
  }
  func.func @transform_4(%arg0: i32, %arg1: i32) -> (i32, i32) {
    %c0_i32 = arith.constant 0 : i32
    %c0_i32_0 = arith.constant 0 : i32
    %c0_i32_1 = arith.constant 0 : i32
    return %c0_i32, %c0_i32_0 : i32, i32
  }
  func.func @transform_5(%arg0: i32, %arg1: i32) -> (i32, i32) {
    %c0_i32 = arith.constant 0 : i32
    %c0_i32_0 = arith.constant 0 : i32
    %c0_i32_1 = arith.constant 0 : i32
    return %c0_i32, %c0_i32_0 : i32, i32
  }
  func.func @transform_6(%arg0: i32, %arg1: i32) -> (i32, i32) {
    %c0_i32 = arith.constant 0 : i32
    %c0_i32_0 = arith.constant 0 : i32
    %c0_i32_1 = arith.constant 0 : i32
    return %c0_i32, %c0_i32_0 : i32, i32
  }
  func.func @transform_7(%arg0: i32, %arg1: i32) -> (i32, i32) {
    %c0_i32 = arith.constant 0 : i32
    %c0_i32_0 = arith.constant 0 : i32
    %c0_i32_1 = arith.constant 0 : i32
    return %c0_i32, %c0_i32_0 : i32, i32
  }
  func.func @transform_8(%arg0: i32, %arg1: i32) -> (i32, i32) {
    %c0_i32 = arith.constant 0 : i32
    %c0_i32_0 = arith.constant 0 : i32
    %c0_i32_1 = arith.constant 0 : i32
    return %c0_i32, %c0_i32_0 : i32, i32
  }
  func.func @transform_9(%arg0: i32, %arg1: i32) -> (i32, i32) {
    %c0_i32 = arith.constant 0 : i32
    %c0_i32_0 = arith.constant 0 : i32
    %c0_i32_1 = arith.constant 0 : i32
    return %c0_i32, %c0_i32_0 : i32, i32
  }
  func.func @transform_10(%arg0: i32, %arg1: i32) -> (i32, i32) {
    %c0_i32 = arith.constant 0 : i32
    %c0_i32_0 = arith.constant 0 : i32
    %c0_i32_1 = arith.constant 0 : i32
    return %c0_i32, %c0_i32_0 : i32, i32
  }
  func.func @transform_11(%arg0: i32, %arg1: i32) -> (i32, i32) {
    %c0_i32 = arith.constant 0 : i32
    %c0_i32_0 = arith.constant 0 : i32
    %c0_i32_1 = arith.constant 0 : i32
    return %c0_i32, %c0_i32_0 : i32, i32
  }
  func.func @transform_12(%arg0: i32, %arg1: i32) -> (i32, i32) {
    %c0_i32 = arith.constant 0 : i32
    %c0_i32_0 = arith.constant 0 : i32
    %c0_i32_1 = arith.constant 0 : i32
    return %c0_i32, %c0_i32_0 : i32, i32
  }
  func.func @transform_13(%arg0: i32, %arg1: i32) -> (i32, i32) {
    %c0_i32 = arith.constant 0 : i32
    %c0_i32_0 = arith.constant 0 : i32
    %c0_i32_1 = arith.constant 0 : i32
    return %c0_i32, %c0_i32_0 : i32, i32
  }
  func.func @transform_14(%arg0: i32, %arg1: i32) -> (i32, i32, i32) {
    %c0_i32 = arith.constant 0 : i32
    %c0_i32_0 = arith.constant 0 : i32
    return %arg0, %arg1, %c0_i32 : i32, i32, i32
  }
}

</mosaic_0001>

<llo_original>
// kernel: tpu_custom_call.1
$region0: #{tpu_custom_call.1}
  #allocation0 [shape = 'u32[]', space=smem, size = 0x4, offset = 0x4, fixed_abs, tag = 'smem constant byte address 0x4 - core index']
  #allocation1 [shape = 'u32[144,128]{1,0:T(1,128)}', space=vmem, size = 0x12000, scoped, tag = 'internal scratch']
  %s0 = inlined_call_operand.vmem [shape: f32[2,4,16,32], index: 0, kind: input, shape index: {}]
  %s1 = inlined_call_operand.vmem [shape: f32[2,4,16,32], index: 1, kind: input, shape index: {}]
  %s2 = inlined_call_operand.hbm [shape: f32[32,40], index: 2, kind: input, shape index: {}]
  %s3 = inlined_call_operand.vmem [shape: f32[1,40], index: 3, kind: input, shape index: {}]
  %s4 = inlined_call_operand.vmem [shape: f32[40,32], index: 4, kind: input, shape index: {}]
  %s5 = inlined_call_operand.vmem [shape: f32[1,32], index: 5, kind: input, shape index: {}]
  %s6 = inlined_call_operand.hbm [shape: f32[32,80], index: 6, kind: input, shape index: {}]
  %s7 = inlined_call_operand.vmem [shape: f32[1,80], index: 7, kind: input, shape index: {}]
  %s8 = inlined_call_operand.vmem [shape: f32[80,64], index: 8, kind: input, shape index: {}]
  %s9 = inlined_call_operand.vmem [shape: f32[1,64], index: 9, kind: input, shape index: {}]
  %s10 = inlined_call_operand.hbm [shape: f32[32,40], index: 10, kind: input, shape index: {}]
  %s11 = inlined_call_operand.vmem [shape: f32[1,40], index: 11, kind: input, shape index: {}]
  %s12 = inlined_call_operand.vmem [shape: f32[40,32], index: 12, kind: input, shape index: {}]
  %s13 = inlined_call_operand.vmem [shape: f32[1,32], index: 13, kind: input, shape index: {}]
  %s14 = inlined_call_operand.hbm [shape: f32[2,16,32], index: 14, kind: output, shape index: {}]
  %s15 = sld [smem:[#allocation0]]
  $region101: #{tpu_custom_call.1} parent=0
    _
  %s17 = ssub.s32 1, %s15
  %s18 = scalar_select 0, %s17, %s15
  $region1: #{tpu_custom_call.1} parent=0
    #allocation2 [shape = 'u8[16384]{0}', space=vmem, size = 0x4000, scoped, tag = 'input window, operand 2, single buffered']
    #allocation3 [shape = 's32[2]{0}', space=sflag, size = 0x8, scoped, tag = 'scoped memory for tpu_custom_call.1']
    #allocation4 [shape = 's32[2]{0}', space=sflag, size = 0x8, scoped, tag = 'scoped memory for tpu_custom_call.1']
    #allocation5 [shape = 'u8[16384]{0}', space=vmem, size = 0x4000, scoped, tag = 'input window, operand 6, single buffered']
    #allocation6 [shape = 's32[1]{0}', space=sflag, size = 0x4, scoped, tag = 'scoped memory for tpu_custom_call.1']
    #allocation7 [shape = 'u8[16384]{0}', space=vmem, size = 0x4000, scoped, tag = 'input window, operand 10, single buffered']
    #allocation8 [shape = 'u8[16384]{0}', space=vmem, size = 0x4000, scoped, tag = 'output window, operand 0']
    %19 = vsyncpa [#allocation3], 0
    %20 = vsyncpa [#allocation6], 0
    %21 = vsyncpa [#allocation4], 0
    %s22 = scalar_lea.sflag [#allocation4], 1
    %23 = vsyncpa %s22, 0
    loop: start=0, step=1, limit=4
    $region2: #{tpu_custom_call.1} parent=1 // loop_pre_header
      _
    $region3: #{tpu_custom_call.1} parent=1 // loop_header
      %s25 = sphi 0, %s29
      %p26 = scmp.ge.s32.totalorder %s25, 4
      %s32 = sphi 0, %s44
      %s33 = sphi 0, %s40
      %s34 = sphi 0, %s32
      %s35 = sphi 0, %s33
      %s36 = sphi 0, %s34
      %s37 = sphi 0, %s35
      %s49 = sphi 0, %s51
      %s52 = sphi 0, %s49
      %s53 = sphi 0, %s52
      %s69 = sphi 0, %s53
      %s77 = sphi 0, %s79
      %s80 = sphi 0, %s77
      %s81 = sphi 0, %s80
      %s97 = sphi 0, %s81
      %s101 = sphi 0, %s101
      %s103 = sphi 0, %s101
      %s104 = sphi 0, %s103
      %s118 = sphi 0, %s104
      %s122 = sphi 0, %s122
      %s124 = sphi 0, %s122
      %s125 = sphi 0, %s124
      %s139 = sphi 0, %s125
      %s143 = sphi 0, %s143
      %s145 = sphi 0, %s143
      %s146 = sphi 0, %s145
      %s160 = sphi 0, %s146
      %s164 = sphi 0, %s164
      %s166 = sphi 0, %s164
      %s167 = sphi 0, %s166
      %s181 = sphi 0, %s167
      %s185 = sphi 0, %s185
      %s187 = sphi 0, %s185
      %s188 = sphi 0, %s187
      %s202 = sphi 0, %s188
      %s206 = sphi 0, %s206
      %s208 = sphi 0, %s206
      %s209 = sphi 0, %s208
      %s223 = sphi 0, %s209
      %s227 = sphi 0, %s227
      %s229 = sphi 0, %s227
      %s230 = sphi 0, %s229
      %s244 = sphi 0, %s230
      %s248 = sphi 0, %s248
      %s250 = sphi 0, %s248
      %s251 = sphi 0, %s250
      %s265 = sphi 0, %s251
      %s269 = sphi 0, %s269
      %s271 = sphi 0, %s269
      %s272 = sphi 0, %s271
      %s286 = sphi 0, %s272
      %s290 = sphi 0, %s290
      %s292 = sphi 0, %s290
      %s293 = sphi 0, %s292
      %s307 = sphi 0, %s293
      %s311 = sphi 0, %s311
      %s313 = sphi 0, %s311
      %s314 = sphi 0, %s313
      %s328 = sphi 0, %s314
      %s332 = sphi 0, %s332
      %s334 = sphi 0, %s332
      %s335 = sphi 0, %s334
      %s349 = sphi 0, %s335
      %s357 = sphi 0, %s359
      %s360 = sphi 0, %s357
      %s361 = sphi 0, %s360
      %s377 = sphi 0, %s361
    $region4: #{tpu_custom_call.1} parent=1 // loop_header_branch
      %28 = sbr.rel (%p26) target = $region8
    $region5: #{tpu_custom_call.1} parent=1 // loop_body
      %s30 = ssub.s32 %s25, 1
      %s31 = ssub.s32 %s25, 2
      %s38 = sadd.s32 1, %s33
      %p39 = scmp.ge.s32.totalorder %s38, 1
      %s40 = scalar_select %p39, 0, %s38
      %s41 = sadd.s32 1, %s32
      %s42 = scalar_select %p39, %s41, %s32
      %p43 = scmp.ge.s32.totalorder %s42, 2
      %s44 = scalar_select %p43, 0, %s42
      %s45 = ssub.s32 %s32, %s44
      %s46 = ssub.s32 %s33, %s40
      %s47 = sor.u32 %s45, %s46
      %p48 = scmp.eq.s32.totalorder %s47, 0
      %s50 = sadd.s32 %s49, 1
      %s51 = scalar_select %p48, %s49, %s50
      %p54 = pneg %p48
      %p55 = scmp.eq.s32.totalorder %s25, 1
      %p56 = por %p54, %p55
      %p57 = scmp.ne.s32.totalorder %s49, %s52
      %p58 = scmp.eq.s32.totalorder %s25, 0
      %p59 = por %p57, %p58
      %p60 = scmp.ne.s32.totalorder %s49, %s52
      %p61 = scmp.eq.s32.totalorder %s30, 1
      %p62 = por %p60, %p61
      %p63 = scmp.ne.s32.totalorder %s52, %s53
      %p64 = scmp.eq.s32.totalorder %s30, 0
      %p65 = por %p63, %p64
      %p66 = scmp.ne.s32.totalorder %s52, %s53
      %p67 = scmp.eq.s32.totalorder %s31, 1
      %p68 = por %p66, %p67
      %p70 = scmp.ne.s32.totalorder %s53, %s69
      %p71 = scmp.eq.s32.totalorder %s31, 0
      %p72 = por %p70, %p71
      %s73 = ssub.s32 %s32, %s44
      %s74 = ssub.s32 %s33, %s40
      %s75 = sor.u32 %s73, %s74
      %p76 = scmp.eq.s32.totalorder %s75, 0
      %s78 = sadd.s32 %s77, 1
      %s79 = scalar_select %p76, %s77, %s78
      %p82 = pneg %p76
      %p83 = scmp.eq.s32.totalorder %s25, 1
      %p84 = por %p82, %p83
      %p85 = scmp.ne.s32.totalorder %s77, %s80
      %p86 = scmp.eq.s32.totalorder %s25, 0
      %p87 = por %p85, %p86
      %p88 = scmp.ne.s32.totalorder %s77, %s80
      %p89 = scmp.eq.s32.totalorder %s30, 1
      %p90 = por %p88, %p89
      %p91 = scmp.ne.s32.totalorder %s80, %s81
      %p92 = scmp.eq.s32.totalorder %s30, 0
      %p93 = por %p91, %p92
      %p94 = scmp.ne.s32.totalorder %s80, %s81
      %p95 = scmp.eq.s32.totalorder %s31, 1
      %p96 = por %p94, %p95
      %p98 = scmp.ne.s32.totalorder %s81, %s97
      %p99 = scmp.eq.s32.totalorder %s31, 0
      %p100 = por %p98, %p99
      %s102 = sadd.s32 %s101, 1
      %p105 = scmp.eq.s32.totalorder %s25, 1
      %p106 = scmp.ne.s32.totalorder %s101, %s103
      %p107 = scmp.eq.s32.totalorder %s25, 0
      %p108 = por %p106, %p107
      %p109 = scmp.ne.s32.totalorder %s101, %s103
      %p110 = scmp.eq.s32.totalorder %s30, 1
      %p111 = por %p109, %p110
      %p112 = scmp.ne.s32.totalorder %s103, %s104
      %p113 = scmp.eq.s32.totalorder %s30, 0
      %p114 = por %p112, %p113
      %p115 = scmp.ne.s32.totalorder %s103, %s104
      %p116 = scmp.eq.s32.totalorder %s31, 1
      %p117 = por %p115, %p116
      %p119 = scmp.ne.s32.totalorder %s104, %s118
      %p120 = scmp.eq.s32.totalorder %s31, 0
      %p121 = por %p119, %p120
      %s123 = sadd.s32 %s122, 1
      %p126 = scmp.eq.s32.totalorder %s25, 1
      %p127 = scmp.ne.s32.totalorder %s122, %s124
      %p128 = scmp.eq.s32.totalorder %s25, 0
      %p129 = por %p127, %p128
      %p130 = scmp.ne.s32.totalorder %s122, %s124
      %p131 = scmp.eq.s32.totalorder %s30, 1
      %p132 = por %p130, %p131
      %p133 = scmp.ne.s32.totalorder %s124, %s125
      %p134 = scmp.eq.s32.totalorder %s30, 0
      %p135 = por %p133, %p134
      %p136 = scmp.ne.s32.totalorder %s124, %s125
      %p137 = scmp.eq.s32.totalorder %s31, 1
      %p138 = por %p136, %p137
      %p140 = scmp.ne.s32.totalorder %s125, %s139
      %p141 = scmp.eq.s32.totalorder %s31, 0
      %p142 = por %p140, %p141
      %s144 = sadd.s32 %s143, 1
      %p147 = scmp.eq.s32.totalorder %s25, 1
      %p148 = scmp.ne.s32.totalorder %s143, %s145
      %p149 = scmp.eq.s32.totalorder %s25, 0
      %p150 = por %p148, %p149
      %p151 = scmp.ne.s32.totalorder %s143, %s145
      %p152 = scmp.eq.s32.totalorder %s30, 1
      %p153 = por %p151, %p152
      %p154 = scmp.ne.s32.totalorder %s145, %s146
      %p155 = scmp.eq.s32.totalorder %s30, 0
      %p156 = por %p154, %p155
      %p157 = scmp.ne.s32.totalorder %s145, %s146
      %p158 = scmp.eq.s32.totalorder %s31, 1
      %p159 = por %p157, %p158
      %p161 = scmp.ne.s32.totalorder %s146, %s160
      %p162 = scmp.eq.s32.totalorder %s31, 0
      %p163 = por %p161, %p162
      %s165 = sadd.s32 %s164, 1
      %p168 = scmp.eq.s32.totalorder %s25, 1
      %p169 = scmp.ne.s32.totalorder %s164, %s166
      %p170 = scmp.eq.s32.totalorder %s25, 0
      %p171 = por %p169, %p170
      %p172 = scmp.ne.s32.totalorder %s164, %s166
      %p173 = scmp.eq.s32.totalorder %s30, 1
      %p174 = por %p172, %p173
      %p175 = scmp.ne.s32.totalorder %s166, %s167
      %p176 = scmp.eq.s32.totalorder %s30, 0
      %p177 = por %p175, %p176
      %p178 = scmp.ne.s32.totalorder %s166, %s167
      %p179 = scmp.eq.s32.totalorder %s31, 1
      %p180 = por %p178, %p179
      %p182 = scmp.ne.s32.totalorder %s167, %s181
      %p183 = scmp.eq.s32.totalorder %s31, 0
      %p184 = por %p182, %p183
      %s186 = sadd.s32 %s185, 1
      %p189 = scmp.eq.s32.totalorder %s25, 1
      %p190 = scmp.ne.s32.totalorder %s185, %s187
      %p191 = scmp.eq.s32.totalorder %s25, 0
      %p192 = por %p190, %p191
      %p193 = scmp.ne.s32.totalorder %s185, %s187
      %p194 = scmp.eq.s32.totalorder %s30, 1
      %p195 = por %p193, %p194
      %p196 = scmp.ne.s32.totalorder %s187, %s188
      %p197 = scmp.eq.s32.totalorder %s30, 0
      %p198 = por %p196, %p197
      %p199 = scmp.ne.s32.totalorder %s187, %s188
      %p200 = scmp.eq.s32.totalorder %s31, 1
      %p201 = por %p199, %p200
      %p203 = scmp.ne.s32.totalorder %s188, %s202
      %p204 = scmp.eq.s32.totalorder %s31, 0
      %p205 = por %p203, %p204
      %s207 = sadd.s32 %s206, 1
      %p210 = scmp.eq.s32.totalorder %s25, 1
      %p211 = scmp.ne.s32.totalorder %s206, %s208
      %p212 = scmp.eq.s32.totalorder %s25, 0
      %p213 = por %p211, %p212
      %p214 = scmp.ne.s32.totalorder %s206, %s208
      %p215 = scmp.eq.s32.totalorder %s30, 1
      %p216 = por %p214, %p215
      %p217 = scmp.ne.s32.totalorder %s208, %s209
      %p218 = scmp.eq.s32.totalorder %s30, 0
      %p219 = por %p217, %p218
      %p220 = scmp.ne.s32.totalorder %s208, %s209
      %p221 = scmp.eq.s32.totalorder %s31, 1
      %p222 = por %p220, %p221
      %p224 = scmp.ne.s32.totalorder %s209, %s223
      %p225 = scmp.eq.s32.totalorder %s31, 0
      %p226 = por %p224, %p225
      %s228 = sadd.s32 %s227, 1
      %p231 = scmp.eq.s32.totalorder %s25, 1
      %p232 = scmp.ne.s32.totalorder %s227, %s229
      %p233 = scmp.eq.s32.totalorder %s25, 0
      %p234 = por %p232, %p233
      %p235 = scmp.ne.s32.totalorder %s227, %s229
      %p236 = scmp.eq.s32.totalorder %s30, 1
      %p237 = por %p235, %p236
      %p238 = scmp.ne.s32.totalorder %s229, %s230
      %p239 = scmp.eq.s32.totalorder %s30, 0
      %p240 = por %p238, %p239
      %p241 = scmp.ne.s32.totalorder %s229, %s230
      %p242 = scmp.eq.s32.totalorder %s31, 1
      %p243 = por %p241, %p242
      %p245 = scmp.ne.s32.totalorder %s230, %s244
      %p246 = scmp.eq.s32.totalorder %s31, 0
      %p247 = por %p245, %p246
      %s249 = sadd.s32 %s248, 1
      %p252 = scmp.eq.s32.totalorder %s25, 1
      %p253 = scmp.ne.s32.totalorder %s248, %s250
      %p254 = scmp.eq.s32.totalorder %s25, 0
      %p255 = por %p253, %p254
      %p256 = scmp.ne.s32.totalorder %s248, %s250
      %p257 = scmp.eq.s32.totalorder %s30, 1
      %p258 = por %p256, %p257
      %p259 = scmp.ne.s32.totalorder %s250, %s251
      %p260 = scmp.eq.s32.totalorder %s30, 0
      %p261 = por %p259, %p260
      %p262 = scmp.ne.s32.totalorder %s250, %s251
      %p263 = scmp.eq.s32.totalorder %s31, 1
      %p264 = por %p262, %p263
      %p266 = scmp.ne.s32.totalorder %s251, %s265
      %p267 = scmp.eq.s32.totalorder %s31, 0
      %p268 = por %p266, %p267
      %s270 = sadd.s32 %s269, 1
      %p273 = scmp.eq.s32.totalorder %s25, 1
      %p274 = scmp.ne.s32.totalorder %s269, %s271
      %p275 = scmp.eq.s32.totalorder %s25, 0
      %p276 = por %p274, %p275
      %p277 = scmp.ne.s32.totalorder %s269, %s271
      %p278 = scmp.eq.s32.totalorder %s30, 1
      %p279 = por %p277, %p278
      %p280 = scmp.ne.s32.totalorder %s271, %s272
      %p281 = scmp.eq.s32.totalorder %s30, 0
      %p282 = por %p280, %p281
      %p283 = scmp.ne.s32.totalorder %s271, %s272
      %p284 = scmp.eq.s32.totalorder %s31, 1
      %p285 = por %p283, %p284
      %p287 = scmp.ne.s32.totalorder %s272, %s286
      %p288 = scmp.eq.s32.totalorder %s31, 0
      %p289 = por %p287, %p288
      %s291 = sadd.s32 %s290, 1
      %p294 = scmp.eq.s32.totalorder %s25, 1
      %p295 = scmp.ne.s32.totalorder %s290, %s292
      %p296 = scmp.eq.s32.totalorder %s25, 0
      %p297 = por %p295, %p296
      %p298 = scmp.ne.s32.totalorder %s290, %s292
      %p299 = scmp.eq.s32.totalorder %s30, 1
      %p300 = por %p298, %p299
      %p301 = scmp.ne.s32.totalorder %s292, %s293
      %p302 = scmp.eq.s32.totalorder %s30, 0
      %p303 = por %p301, %p302
      %p304 = scmp.ne.s32.totalorder %s292, %s293
      %p305 = scmp.eq.s32.totalorder %s31, 1
      %p306 = por %p304, %p305
      %p308 = scmp.ne.s32.totalorder %s293, %s307
      %p309 = scmp.eq.s32.totalorder %s31, 0
      %p310 = por %p308, %p309
      %s312 = sadd.s32 %s311, 1
      %p315 = scmp.eq.s32.totalorder %s25, 1
      %p316 = scmp.ne.s32.totalorder %s311, %s313
      %p317 = scmp.eq.s32.totalorder %s25, 0
      %p318 = por %p316, %p317
      %p319 = scmp.ne.s32.totalorder %s311, %s313
      %p320 = scmp.eq.s32.totalorder %s30, 1
      %p321 = por %p319, %p320
      %p322 = scmp.ne.s32.totalorder %s313, %s314
      %p323 = scmp.eq.s32.totalorder %s30, 0
      %p324 = por %p322, %p323
      %p325 = scmp.ne.s32.totalorder %s313, %s314
      %p326 = scmp.eq.s32.totalorder %s31, 1
      %p327 = por %p325, %p326
      %p329 = scmp.ne.s32.totalorder %s314, %s328
      %p330 = scmp.eq.s32.totalorder %s31, 0
      %p331 = por %p329, %p330
      %s333 = sadd.s32 %s332, 1
      %p336 = scmp.eq.s32.totalorder %s25, 1
      %p337 = scmp.ne.s32.totalorder %s332, %s334
      %p338 = scmp.eq.s32.totalorder %s25, 0
      %p339 = por %p337, %p338
      %p340 = scmp.ne.s32.totalorder %s332, %s334
      %p341 = scmp.eq.s32.totalorder %s30, 1
      %p342 = por %p340, %p341
      %p343 = scmp.ne.s32.totalorder %s334, %s335
      %p344 = scmp.eq.s32.totalorder %s30, 0
      %p345 = por %p343, %p344
      %p346 = scmp.ne.s32.totalorder %s334, %s335
      %p347 = scmp.eq.s32.totalorder %s31, 1
      %p348 = por %p346, %p347
      %p350 = scmp.ne.s32.totalorder %s335, %s349
      %p351 = scmp.eq.s32.totalorder %s31, 0
      %p352 = por %p350, %p351
      %s353 = ssub.s32 %s32, %s44
      %s354 = ssub.s32 %s33, %s40
      %s355 = sor.u32 %s353, %s354
      %p356 = scmp.eq.s32.totalorder %s355, 0
      %s358 = sadd.s32 %s357, 1
      %s359 = scalar_select %p356, %s357, %s358
      %p362 = pneg %p356
      %p363 = scmp.eq.s32.totalorder %s25, 1
      %p364 = por %p362, %p363
      %p365 = scmp.ne.s32.totalorder %s357, %s360
      %p366 = scmp.eq.s32.totalorder %s25, 0
      %p367 = por %p365, %p366
      %p368 = scmp.ne.s32.totalorder %s357, %s360
      %p369 = scmp.eq.s32.totalorder %s30, 1
      %p370 = por %p368, %p369
      %p371 = scmp.ne.s32.totalorder %s360, %s361
      %p372 = scmp.eq.s32.totalorder %s30, 0
      %p373 = por %p371, %p372
      %p374 = scmp.ne.s32.totalorder %s360, %s361
      %p375 = scmp.eq.s32.totalorder %s31, 1
      %p376 = por %p374, %p375
      %p378 = scmp.ne.s32.totalorder %s361, %s377
      %p379 = scmp.eq.s32.totalorder %s31, 0
      %p380 = por %p378, %p379
      %p381 = scmp.le.s32.totalorder 1, %s25
      %p382 = scmp.lt.s32.totalorder %s25, 3
      %p383 = pnand %p381, %p382
      %p384 = pneg %p383
      // Predicated region
      $region9: #{tpu_custom_call.1} parent=5 // pred_check
        _
      $region10: #{tpu_custom_call.1} parent=5 // pred_check_branch
        %386 = sbr.rel (%p383) target = $region12
      $region11: #{tpu_custom_call.1} parent=5 // pred_region
        %s387 = ssub.s32 %s25, 1
        // Predicated region
        $region13: #{tpu_custom_call.1} parent=11 // pred_check
          %p388 = pneg %p114
        $region14: #{tpu_custom_call.1} parent=11 // pred_check_branch
          %390 = sbr.rel (%p388) target = $region16
        $region15: #{tpu_custom_call.1} parent=11 // pred_region
          %s392 = ssub.s32 512, 512
          %393 = vsyncadd [#allocation3], %s392
          %s394 = sshll.u32 [#allocation2], 4
          %s395 = int_to_ptr.vmem [resolvable:$true] %s394
          %400 = dma.hbm_to_vmem [thread:$0]  %s2, 512, %s395, [#allocation3], 128, 128, 8
        $region16: #{tpu_custom_call.1} parent=11 // pred_fallthru
          _
        // Predicated region
        $region17: #{tpu_custom_call.1} parent=11 // pred_check
          %p401 = pneg %p135
        $region18: #{tpu_custom_call.1} parent=11 // pred_check_branch
          %403 = sbr.rel (%p401) target = $region20
        $region19: #{tpu_custom_call.1} parent=11 // pred_region
          _
        $region20: #{tpu_custom_call.1} parent=11 // pred_fallthru
          _
        // Predicated region
        $region21: #{tpu_custom_call.1} parent=11 // pred_check
          %p404 = pneg %p156
        $region22: #{tpu_custom_call.1} parent=11 // pred_check_branch
          %406 = sbr.rel (%p404) target = $region24
        $region23: #{tpu_custom_call.1} parent=11 // pred_region
          _
        $region24: #{tpu_custom_call.1} parent=11 // pred_fallthru
          _
        // Predicated region
        $region25: #{tpu_custom_call.1} parent=11 // pred_check
          %p407 = pneg %p177
        $region26: #{tpu_custom_call.1} parent=11 // pred_check_branch
          %409 = sbr.rel (%p407) target = $region28
        $region27: #{tpu_custom_call.1} parent=11 // pred_region
          _
        $region28: #{tpu_custom_call.1} parent=11 // pred_fallthru
          _
        // Predicated region
        $region29: #{tpu_custom_call.1} parent=11 // pred_check
          %p410 = pneg %p198
        $region30: #{tpu_custom_call.1} parent=11 // pred_check_branch
          %412 = sbr.rel (%p410) target = $region32
        $region31: #{tpu_custom_call.1} parent=11 // pred_region
          %s414 = ssub.s32 512, 512
          %415 = vsyncadd [#allocation6], %s414
          %s416 = sshll.u32 [#allocation5], 4
          %s417 = int_to_ptr.vmem [resolvable:$true] %s416
          %422 = dma.hbm_to_vmem [thread:$0]  %s6, 512, %s417, [#allocation6], 128, 128, 8
        $region32: #{tpu_custom_call.1} parent=11 // pred_fallthru
          _
        // Predicated region
        $region33: #{tpu_custom_call.1} parent=11 // pred_check
          %p423 = pneg %p219
        $region34: #{tpu_custom_call.1} parent=11 // pred_check_branch
          %425 = sbr.rel (%p423) target = $region36
        $region35: #{tpu_custom_call.1} parent=11 // pred_region
          _
        $region36: #{tpu_custom_call.1} parent=11 // pred_fallthru
          _
        // Predicated region
        $region37: #{tpu_custom_call.1} parent=11 // pred_check
          %p426 = pneg %p240
        $region38: #{tpu_custom_call.1} parent=11 // pred_check_branch
          %428 = sbr.rel (%p426) target = $region40
        $region39: #{tpu_custom_call.1} parent=11 // pred_region
          _
        $region40: #{tpu_custom_call.1} parent=11 // pred_fallthru
          _
        // Predicated region
        $region41: #{tpu_custom_call.1} parent=11 // pred_check
          %p429 = pneg %p261
        $region42: #{tpu_custom_call.1} parent=11 // pred_check_branch
          %431 = sbr.rel (%p429) target = $region44
        $region43: #{tpu_custom_call.1} parent=11 // pred_region
          _
        $region44: #{tpu_custom_call.1} parent=11 // pred_fallthru
          _
        // Predicated region
        $region45: #{tpu_custom_call.1} parent=11 // pred_check
          %p432 = pneg %p282
        $region46: #{tpu_custom_call.1} parent=11 // pred_check_branch
          %434 = sbr.rel (%p432) target = $region48
        $region47: #{tpu_custom_call.1} parent=11 // pred_region
          %s436 = ssub.s32 512, 512
          %437 = vsyncadd [#allocation6], %s436
          %s438 = sshll.u32 [#allocation7], 4
          %s439 = int_to_ptr.vmem [resolvable:$true] %s438
          %444 = dma.hbm_to_vmem [thread:$0]  %s10, 512, %s439, [#allocation6], 128, 128, 8
        $region48: #{tpu_custom_call.1} parent=11 // pred_fallthru
          _
        // Predicated region
        $region49: #{tpu_custom_call.1} parent=11 // pred_check
          %p445 = pneg %p303
        $region50: #{tpu_custom_call.1} parent=11 // pred_check_branch
          %447 = sbr.rel (%p445) target = $region52
        $region51: #{tpu_custom_call.1} parent=11 // pred_region
          _
        $region52: #{tpu_custom_call.1} parent=11 // pred_fallthru
          _
        // Predicated region
        $region53: #{tpu_custom_call.1} parent=11 // pred_check
          %p448 = pneg %p324
        $region54: #{tpu_custom_call.1} parent=11 // pred_check_branch
          %450 = sbr.rel (%p448) target = $region56
        $region55: #{tpu_custom_call.1} parent=11 // pred_region
          _
        $region56: #{tpu_custom_call.1} parent=11 // pred_fallthru
          _
        // Predicated region
        $region57: #{tpu_custom_call.1} parent=11 // pred_check
          %p451 = pneg %p345
        $region58: #{tpu_custom_call.1} parent=11 // pred_check_branch
          %453 = sbr.rel (%p451) target = $region60
        $region59: #{tpu_custom_call.1} parent=11 // pred_region
          _
        $region60: #{tpu_custom_call.1} parent=11 // pred_fallthru
          _
      $region12: #{tpu_custom_call.1} parent=5 // pred_fallthru
        _
      %p454 = scmp.lt.s32.totalorder %s25, 2
      // Predicated region
      $region61: #{tpu_custom_call.1} parent=5 // pred_check
        %p455 = pneg %p454
      $region62: #{tpu_custom_call.1} parent=5 // pred_check_branch
        %457 = sbr.rel (%p455) target = $region64
      $region63: #{tpu_custom_call.1} parent=5 // pred_region
        // Predicated region
        $region65: #{tpu_custom_call.1} parent=63 // pred_check
          %p458 = pneg %p59
        $region66: #{tpu_custom_call.1} parent=63 // pred_check_branch
          %460 = sbr.rel (%p458) target = $region68
        $region67: #{tpu_custom_call.1} parent=63 // pred_region
          %s461 = smul.u32 2, %s33
          %p462 = scmp.lt.s32.totalorder %s32, 1
          %s463 = scalar_select %p462, %s32, 1
          %p464 = scmp.lt.s32.totalorder %s461, 1
          %s465 = scalar_select %p464, %s461, 1
          %s466 = smul.addr %s463, 8
          %s467 = sadd.s32 %s465, %s466
          %s468 = smul.addr %s467, 8
          %s469 = scalar_lea.vmem %s0, %s468
          %s470 = smul.u32 2, %s33
        $region68: #{tpu_custom_call.1} parent=63 // pred_fallthru
          _
        // Predicated region
        $region69: #{tpu_custom_call.1} parent=63 // pred_check
          %p471 = pneg %p87
        $region70: #{tpu_custom_call.1} parent=63 // pred_check_branch
          %473 = sbr.rel (%p471) target = $region72
        $region71: #{tpu_custom_call.1} parent=63 // pred_region
          %s474 = smul.u32 2, %s33
          %p475 = scmp.lt.s32.totalorder %s32, 1
          %s476 = scalar_select %p475, %s32, 1
          %p477 = scmp.lt.s32.totalorder %s474, 1
          %s478 = scalar_select %p477, %s474, 1
          %s479 = smul.addr %s476, 8
          %s480 = sadd.s32 %s478, %s479
          %s481 = smul.addr %s480, 8
          %s482 = scalar_lea.vmem %s1, %s481
          %s483 = smul.u32 2, %s33
        $region72: #{tpu_custom_call.1} parent=63 // pred_fallthru
          _
      $region64: #{tpu_custom_call.1} parent=5 // pred_fallthru
        _
      %p484 = scmp.le.s32.totalorder 1, %s25
      %p485 = scmp.lt.s32.totalorder %s25, 3
      %p486 = pnand %p484, %p485
      %p487 = pneg %p486
      // Predicated region
      $region73: #{tpu_custom_call.1} parent=5 // pred_check
        _
      $region74: #{tpu_custom_call.1} parent=5 // pred_check_branch
        %489 = sbr.rel (%p486) target = $region76
      $region75: #{tpu_custom_call.1} parent=5 // pred_region
        %s490 = ssub.s32 %s25, 1
        // Predicated region
        $region77: #{tpu_custom_call.1} parent=75 // pred_check
          %p491 = pneg %p114
        $region78: #{tpu_custom_call.1} parent=75 // pred_check_branch
          %493 = sbr.rel (%p491) target = $region80
        $region79: #{tpu_custom_call.1} parent=75 // pred_region
          %494 = dma.done [#allocation3], 512
        $region80: #{tpu_custom_call.1} parent=75 // pred_fallthru
          _
        // Predicated region
        $region81: #{tpu_custom_call.1} parent=75 // pred_check
          %p495 = pneg %p198
        $region82: #{tpu_custom_call.1} parent=75 // pred_check_branch
          %497 = sbr.rel (%p495) target = $region84
        $region83: #{tpu_custom_call.1} parent=75 // pred_region
          %498 = dma.done [#allocation6], 512
        $region84: #{tpu_custom_call.1} parent=75 // pred_fallthru
          _
        // Predicated region
        $region85: #{tpu_custom_call.1} parent=75 // pred_check
          %p499 = pneg %p282
        $region86: #{tpu_custom_call.1} parent=75 // pred_check_branch
          %501 = sbr.rel (%p499) target = $region88
        $region87: #{tpu_custom_call.1} parent=75 // pred_region
          %502 = dma.done [#allocation6], 512
        $region88: #{tpu_custom_call.1} parent=75 // pred_fallthru
          _
        %s503 = smul.u32 2, %s35
        %p504 = scmp.lt.s32.totalorder %s34, 1
        %s505 = scalar_select %p504, %s34, 1
        %p506 = scmp.lt.s32.totalorder %s503, 1
        %s507 = scalar_select %p506, %s503, 1
        %s508 = smul.addr %s505, 8
        %s509 = sadd.s32 %s507, %s508
        %s510 = smul.addr %s509, 8
        %s511 = scalar_lea.vmem %s0, %s510
        %p512 = pneg %p65
        %p513 = pneg %p62
        %s514 = smul.u32 2, %s35
        %p515 = scmp.lt.s32.totalorder %s34, 1
        %s516 = scalar_select %p515, %s34, 1
        %p517 = scmp.lt.s32.totalorder %s514, 1
        %s518 = scalar_select %p517, %s514, 1
        %s519 = smul.addr %s516, 8
        %s520 = sadd.s32 %s518, %s519
        %s521 = smul.addr %s520, 8
        %s522 = scalar_lea.vmem %s1, %s521
        %p523 = pneg %p93
        %p524 = pneg %p90
        %p525 = pneg %p114
        %p526 = pneg %p111
        %p527 = pneg %p135
        %p528 = pneg %p132
        %p529 = pneg %p156
        %p530 = pneg %p153
        %p531 = pneg %p177
        %p532 = pneg %p174
        %p533 = pneg %p198
        %p534 = pneg %p195
        %p535 = pneg %p219
        %p536 = pneg %p216
        %p537 = pneg %p240
        %p538 = pneg %p237
        %p539 = pneg %p261
        %p540 = pneg %p258
        %p541 = pneg %p282
        %p542 = pneg %p279
        %p543 = pneg %p303
        %p544 = pneg %p300
        %p545 = pneg %p324
        %p546 = pneg %p321
        %p547 = pneg %p345
        %p548 = pneg %p342
        %p549 = pneg %p373
        %p550 = pneg %p370
        %s551 = sand.u32 %s360, 1
        %s552 = scalar_lea.sflag [#allocation4], %s551
        %s553 = sand.u32 %s360, 1
        %s554 = smul.addr %s553, 16
        %s555 = scalar_lea.vmem [#allocation8], %s554
        %s556 = smul.u32 2, %s35
        %p557 = scmp.lt.s32.totalorder %s34, 1
        %s558 = scalar_select %p557, %s34, 1
        %p559 = scmp.lt.s32.totalorder %s556, 1
        %s560 = scalar_select %p559, %s556, 1
        %s561 = smul.addr %s558, 8
        %s562 = sadd.s32 %s560, %s561
        %s563 = smul.addr %s562, 8
        %s564 = scalar_lea.vmem %s0, %s563
        %s565 = smul.u32 2, %s35
        %s566 = smul.u32 2, %s35
        %p567 = scmp.lt.s32.totalorder %s34, 1
        %s568 = scalar_select %p567, %s34, 1
        %p569 = scmp.lt.s32.totalorder %s566, 1
        %s570 = scalar_select %p569, %s566, 1
        %s571 = smul.addr %s568, 8
        %s572 = sadd.s32 %s570, %s571
        %s573 = smul.addr %s572, 8
        %s574 = scalar_lea.vmem %s1, %s573
        %s575 = smul.u32 2, %s35
        %s576 = smul.u32 2, %s35
        %v577 = vld [vmem:[%s564] sm:$0xff]
        %v578 = vld [vmem:[%s564 + $0x8] sm:$0xff]
        %v579 = vld [vmem:[%s564 + $0x10] sm:$0xff]
        %v580 = vld [vmem:[%s564 + $0x18] sm:$0xff]
        %v581 = vld [vmem:[%s564 + $0x20] sm:$0xff]
        %v582 = vld [vmem:[%s564 + $0x28] sm:$0xff]
        %v583 = vld [vmem:[%s564 + $0x30] sm:$0xff]
        %v584 = vld [vmem:[%s564 + $0x38] sm:$0xff]
        %v585 = vld [vmem:[%s574] sm:$0xff]
        %v586 = vld [vmem:[%s574 + $0x8] sm:$0xff]
        %v587 = vld [vmem:[%s574 + $0x10] sm:$0xff]
        %v588 = vld [vmem:[%s574 + $0x18] sm:$0xff]
        %v589 = vld [vmem:[%s574 + $0x20] sm:$0xff]
        %v590 = vld [vmem:[%s574 + $0x28] sm:$0xff]
        %v591 = vld [vmem:[%s574 + $0x30] sm:$0xff]
        %v592 = vld [vmem:[%s574 + $0x38] sm:$0xff]
        %v593 = vld [vmem:[#allocation2] sm:$0xff]
        %v594 = vld [vmem:[#allocation2 + $0x8] sm:$0xff]
        %v595 = vld [vmem:[#allocation2 + $0x10] sm:$0xff]
        %v596 = vld [vmem:[#allocation2 + $0x18] sm:$0xff]
        %v597 = vld [vmem:[%s3] sm:$0x1]
        %v599 = vlaneseq
        %v600 = vshrl.u32 %v599, 7
        %v601 = vsub.s32 0, %v600
        %v602 = vrot.slane %v597, %v601
        %vm604 = vcmask 261120
        %v606 = vsel %vm604, %v577, 0
        %v609 = vsel %vm604, %v578, 0
        %v612 = vsel %vm604, %v579, 0
        %v615 = vsel %vm604, %v580, 0
        %v618 = vsel %vm604, %v581, 0
        %v621 = vsel %vm604, %v582, 0
        %v624 = vsel %vm604, %v583, 0
        %v627 = vsel %vm604, %v584, 0
        %629 = vmatprep.subr.mxu0 0.0
        %630 = vmatpush1.msra.mxu0 0.0
        %631 = vmatprep.subr.mxu0 0.0
        %632 = vmatpush1.msra.mxu0 0.0
        %633 = vmatprep.subr.mxu0 0.0
        %634 = vmatpush1.msra.mxu0 0.0
        %635 = vmatprep.subr.mxu0 0.0
        %636 = vmatpush1.msra.mxu0 0.0
        %637 = vmatprep.subr.mxu0 0.0
        %638 = vmatpush1.msra.mxu0 0.0
        %639 = vmatprep.subr.mxu0 0.0
        %640 = vmatpush1.msra.mxu0 0.0
        %641 = vmatprep.subr.mxu0 0.0
        %642 = vmatpush1.msra.mxu0 0.0
        %643 = vmatprep.subr.mxu0 0.0
        %644 = vmatpush1.msra.mxu0 0.0
        %645 = vmatprep.subr.mxu0 0.0
        %646 = vmatpush1.msra.mxu0 0.0
        %647 = vmatprep.subr.mxu0 0.0
        %648 = vmatpush1.msra.mxu0 0.0
        %649 = vmatprep.subr.mxu0 0.0
        %650 = vmatpush1.msra.mxu0 0.0
        %651 = vmatprep.subr.mxu0 0.0
        %652 = vmatpush1.msra.mxu0 0.0
        %653 = vmatprep.subr.mxu0 0.0
        %654 = vmatpush1.msra.mxu0 %v596
        %655 = vmatprep.subr.mxu0 0.0
        %656 = vmatpush1.msra.mxu0 %v595
        %657 = vmatprep.subr.mxu0 0.0
        %658 = vmatpush1.msra.mxu0 %v594
        %659 = vmatprep.subr.mxu0 0.0
        %660 = vmatpush1.msra.mxu0 %v593
        %661 = vmatprep.subr.mxu0 0.0
        %662 = vmatpush2.msra.mxu0 0.0
        %663 = vmatprep.subr.mxu0 0.0
        %664 = vmatpush2.msra.mxu0 0.0
        %665 = vmatprep.subr.mxu0 0.0
        %666 = vmatpush2.msra.mxu0 0.0
        %667 = vmatprep.subr.mxu0 0.0
        %668 = vmatpush2.msra.mxu0 0.0
        %669 = vmatprep.subr.mxu0 0.0
        %670 = vmatpush2.msra.mxu0 0.0
        %671 = vmatprep.subr.mxu0 0.0
        %672 = vmatpush2.msra.mxu0 0.0
        %673 = vmatprep.subr.mxu0 0.0
        %674 = vmatpush2.msra.mxu0 0.0
        %675 = vmatprep.subr.mxu0 0.0
        %676 = vmatpush2.msra.mxu0 0.0
        %677 = vmatprep.subr.mxu0 0.0
        %678 = vmatpush2.msra.mxu0 0.0
        %679 = vmatprep.subr.mxu0 0.0
        %680 = vmatpush2.msra.mxu0 0.0
        %681 = vmatprep.subr.mxu0 0.0
        %682 = vmatpush2.msra.mxu0 0.0
        %683 = vmatprep.subr.mxu0 0.0
        %684 = vmatpush2.msra.mxu0 0.0
        %685 = vmatprep.subr.mxu0 0.0
        %686 = vmatpush2.msra.mxu0 0.0
        %687 = vmatprep.subr.mxu0 0.0
        %688 = vmatpush2.msra.mxu0 0.0
        %689 = vmatprep.subr.mxu0 0.0
        %690 = vmatpush2.msra.mxu0 0.0
        %691 = vmatprep.subr.mxu0 0.0
        %692 = vmatpush2.msra.mxu0 0.0
        %693 = vmatprep.mubr.f32.mxu0 0.0
        %694 = vmatmul.mubr.f32.gmra.mxu0 %v606
        %v695 = vpop.f32.mrf.mxu0
        %v696 = vadd.f32 %v602, %v695
        %v697 = vpop.f32.mrf.mxu0
        %698 = vmatprep.mubr.f32.mxu0 0.0
        %699 = vmatmul.mubr.f32.gmra.mxu0 %v609
        %v700 = vpop.f32.mrf.mxu0
        %v701 = vadd.f32 %v602, %v700
        %v702 = vpop.f32.mrf.mxu0
        %703 = vmatprep.mubr.f32.mxu0 0.0
        %704 = vmatmul.mubr.f32.gmra.mxu0 %v612
        %v705 = vpop.f32.mrf.mxu0
        %v706 = vadd.f32 %v602, %v705
        %v707 = vpop.f32.mrf.mxu0
        %708 = vmatprep.mubr.f32.mxu0 0.0
        %709 = vmatmul.mubr.f32.gmra.mxu0 %v615
        %v710 = vpop.f32.mrf.mxu0
        %v711 = vadd.f32 %v602, %v710
        %v712 = vpop.f32.mrf.mxu0
        %713 = vmatprep.mubr.f32.mxu0 0.0
        %714 = vmatmul.mubr.f32.gmra.mxu0 %v618
        %v715 = vpop.f32.mrf.mxu0
        %v716 = vadd.f32 %v602, %v715
        %v717 = vpop.f32.mrf.mxu0
        %718 = vmatprep.mubr.f32.mxu0 0.0
        %719 = vmatmul.mubr.f32.gmra.mxu0 %v621
        %v720 = vpop.f32.mrf.mxu0
        %v721 = vadd.f32 %v602, %v720
        %v722 = vpop.f32.mrf.mxu0
        %723 = vmatprep.mubr.f32.mxu0 0.0
        %724 = vmatmul.mubr.f32.gmra.mxu0 %v624
        %v725 = vpop.f32.mrf.mxu0
        %v726 = vadd.f32 %v602, %v725
        %v727 = vpop.f32.mrf.mxu0
        %728 = vmatprep.mubr.f32.mxu0 0.0
        %729 = vmatmul.mubr.f32.gmra.mxu0 %v627
        %v730 = vpop.f32.mrf.mxu0
        %v731 = vadd.f32 %v602, %v730
        %v732 = vpop.f32.mrf.mxu0
        %733 = vdwg.mxu0
        %v734 = vmax.f32 %v696, 0.0
        %v735 = vmax.f32 %v701, 0.0
        %v736 = vmax.f32 %v706, 0.0
        %v737 = vmax.f32 %v711, 0.0
        %v738 = vmax.f32 %v716, 0.0
        %v739 = vmax.f32 %v721, 0.0
        %v740 = vmax.f32 %v726, 0.0
        %v741 = vmax.f32 %v731, 0.0
        %v742 = vld [vmem:[%s4] sm:$0xff]
        %v743 = vld [vmem:[%s4 + $0x8] sm:$0xff]
        %v744 = vld [vmem:[%s4 + $0x10] sm:$0xff]
        %v745 = vld [vmem:[%s4 + $0x18] sm:$0xff]
        %v746 = vld [vmem:[%s4 + $0x20] sm:$0xff]
        %v747 = vld [vmem:[%s5] sm:$0x1]
        %v749 = vlaneseq
        %v750 = vshrl.u32 %v749, 7
        %v751 = vsub.s32 0, %v750
        %v752 = vrot.slane %v747, %v751
        %vm754 = vcmask 326656
        %v756 = vsel %vm754, %v734, 0
        %v759 = vsel %vm754, %v735, 0
        %v762 = vsel %vm754, %v736, 0
        %v765 = vsel %vm754, %v737, 0
        %v768 = vsel %vm754, %v738, 0
        %v771 = vsel %vm754, %v739, 0
        %v774 = vsel %vm754, %v740, 0
        %v777 = vsel %vm754, %v741, 0
        %779 = vmatprep.subr.mxu0 0.0
        %780 = vmatpush1.msra.mxu0 0.0
        %781 = vmatprep.subr.mxu0 0.0
        %782 = vmatpush1.msra.mxu0 0.0
        %783 = vmatprep.subr.mxu0 0.0
        %784 = vmatpush1.msra.mxu0 0.0
        %785 = vmatprep.subr.mxu0 0.0
        %786 = vmatpush1.msra.mxu0 0.0
        %787 = vmatprep.subr.mxu0 0.0
        %788 = vmatpush1.msra.mxu0 0.0
        %789 = vmatprep.subr.mxu0 0.0
        %790 = vmatpush1.msra.mxu0 0.0
        %791 = vmatprep.subr.mxu0 0.0
        %792 = vmatpush1.msra.mxu0 0.0
        %793 = vmatprep.subr.mxu0 0.0
        %794 = vmatpush1.msra.mxu0 0.0
        %795 = vmatprep.subr.mxu0 0.0
        %796 = vmatpush1.msra.mxu0 0.0
        %797 = vmatprep.subr.mxu0 0.0
        %798 = vmatpush1.msra.mxu0 0.0
        %799 = vmatprep.subr.mxu0 0.0
        %800 = vmatpush1.msra.mxu0 0.0
        %801 = vmatprep.subr.mxu0 0.0
        %802 = vmatpush1.msra.mxu0 %v746
        %803 = vmatprep.subr.mxu0 0.0
        %804 = vmatpush1.msra.mxu0 %v745
        %805 = vmatprep.subr.mxu0 0.0
        %806 = vmatpush1.msra.mxu0 %v744
        %807 = vmatprep.subr.mxu0 0.0
        %808 = vmatpush1.msra.mxu0 %v743
        %809 = vmatprep.subr.mxu0 0.0
        %810 = vmatpush1.msra.mxu0 %v742
        %811 = vmatprep.subr.mxu0 0.0
        %812 = vmatpush2.msra.mxu0 0.0
        %813 = vmatprep.subr.mxu0 0.0
        %814 = vmatpush2.msra.mxu0 0.0
        %815 = vmatprep.subr.mxu0 0.0
        %816 = vmatpush2.msra.mxu0 0.0
        %817 = vmatprep.subr.mxu0 0.0
        %818 = vmatpush2.msra.mxu0 0.0
        %819 = vmatprep.subr.mxu0 0.0
        %820 = vmatpush2.msra.mxu0 0.0
        %821 = vmatprep.subr.mxu0 0.0
        %822 = vmatpush2.msra.mxu0 0.0
        %823 = vmatprep.subr.mxu0 0.0
        %824 = vmatpush2.msra.mxu0 0.0
        %825 = vmatprep.subr.mxu0 0.0
        %826 = vmatpush2.msra.mxu0 0.0
        %827 = vmatprep.subr.mxu0 0.0
        %828 = vmatpush2.msra.mxu0 0.0
        %829 = vmatprep.subr.mxu0 0.0
        %830 = vmatpush2.msra.mxu0 0.0
        %831 = vmatprep.subr.mxu0 0.0
        %832 = vmatpush2.msra.mxu0 0.0
        %833 = vmatprep.subr.mxu0 0.0
        %834 = vmatpush2.msra.mxu0 0.0
        %835 = vmatprep.subr.mxu0 0.0
        %836 = vmatpush2.msra.mxu0 0.0
        %837 = vmatprep.subr.mxu0 0.0
        %838 = vmatpush2.msra.mxu0 0.0
        %839 = vmatprep.subr.mxu0 0.0
        %840 = vmatpush2.msra.mxu0 0.0
        %841 = vmatprep.subr.mxu0 0.0
        %842 = vmatpush2.msra.mxu0 0.0
        %843 = vmatprep.mubr.f32.mxu0 0.0
        %844 = vmatmul.mubr.f32.gmra.mxu0 %v756
        %v845 = vpop.f32.mrf.mxu0
        %v846 = vadd.f32 %v752, %v845
        %v847 = vpop.f32.mrf.mxu0
        %848 = vmatprep.mubr.f32.mxu0 0.0
        %849 = vmatmul.mubr.f32.gmra.mxu0 %v759
        %v850 = vpop.f32.mrf.mxu0
        %v851 = vadd.f32 %v752, %v850
        %v852 = vpop.f32.mrf.mxu0
        %853 = vmatprep.mubr.f32.mxu0 0.0
        %854 = vmatmul.mubr.f32.gmra.mxu0 %v762
        %v855 = vpop.f32.mrf.mxu0
        %v856 = vadd.f32 %v752, %v855
        %v857 = vpop.f32.mrf.mxu0
        %858 = vmatprep.mubr.f32.mxu0 0.0
        %859 = vmatmul.mubr.f32.gmra.mxu0 %v765
        %v860 = vpop.f32.mrf.mxu0
        %v861 = vadd.f32 %v752, %v860
        %v862 = vpop.f32.mrf.mxu0
        %863 = vmatprep.mubr.f32.mxu0 0.0
        %864 = vmatmul.mubr.f32.gmra.mxu0 %v768
        %v865 = vpop.f32.mrf.mxu0
        %v866 = vadd.f32 %v752, %v865
        %v867 = vpop.f32.mrf.mxu0
        %868 = vmatprep.mubr.f32.mxu0 0.0
        %869 = vmatmul.mubr.f32.gmra.mxu0 %v771
        %v870 = vpop.f32.mrf.mxu0
        %v871 = vadd.f32 %v752, %v870
        %v872 = vpop.f32.mrf.mxu0
        %873 = vmatprep.mubr.f32.mxu0 0.0
        %874 = vmatmul.mubr.f32.gmra.mxu0 %v774
        %v875 = vpop.f32.mrf.mxu0
        %v876 = vadd.f32 %v752, %v875
        %v877 = vpop.f32.mrf.mxu0
        %878 = vmatprep.mubr.f32.mxu0 0.0
        %879 = vmatmul.mubr.f32.gmra.mxu0 %v777
        %v880 = vpop.f32.mrf.mxu0
        %v881 = vadd.f32 %v752, %v880
        %v882 = vpop.f32.mrf.mxu0
        %883 = vdwg.mxu0
        %v884 = vmax.f32 %v846, 0.0
        %v885 = vmax.f32 %v851, 0.0
        %v886 = vmax.f32 %v856, 0.0
        %v887 = vmax.f32 %v861, 0.0
        %v888 = vmax.f32 %v866, 0.0
        %v889 = vmax.f32 %v871, 0.0
        %v890 = vmax.f32 %v876, 0.0
        %v891 = vmax.f32 %v881, 0.0
        %v892 = vld [vmem:[#allocation5] sm:$0xff]
        %v893 = vld [vmem:[#allocation5 + $0x8] sm:$0xff]
        %v894 = vld [vmem:[#allocation5 + $0x10] sm:$0xff]
        %v895 = vld [vmem:[#allocation5 + $0x18] sm:$0xff]
        %v896 = vld [vmem:[%s7] sm:$0x1]
        %v898 = vlaneseq
        %v899 = vshrl.u32 %v898, 7
        %v900 = vsub.s32 0, %v899
        %v901 = vrot.slane %v896, %v900
        %v904 = vsel %vm604, %v585, 0
        %v907 = vsel %vm604, %v586, 0
        %v910 = vsel %vm604, %v587, 0
        %v913 = vsel %vm604, %v588, 0
        %v916 = vsel %vm604, %v589, 0
        %v919 = vsel %vm604, %v590, 0
        %v922 = vsel %vm604, %v591, 0
        %v925 = vsel %vm604, %v592, 0
        %927 = vmatprep.subr.mxu0 0.0
        %928 = vmatpush1.msra.mxu0 0.0
        %929 = vmatprep.subr.mxu0 0.0
        %930 = vmatpush1.msra.mxu0 0.0
        %931 = vmatprep.subr.mxu0 0.0
        %932 = vmatpush1.msra.mxu0 0.0
        %933 = vmatprep.subr.mxu0 0.0
        %934 = vmatpush1.msra.mxu0 0.0
        %935 = vmatprep.subr.mxu0 0.0
        %936 = vmatpush1.msra.mxu0 0.0
        %937 = vmatprep.subr.mxu0 0.0
        %938 = vmatpush1.msra.mxu0 0.0
        %939 = vmatprep.subr.mxu0 0.0
        %940 = vmatpush1.msra.mxu0 0.0
        %941 = vmatprep.subr.mxu0 0.0
        %942 = vmatpush1.msra.mxu0 0.0
        %943 = vmatprep.subr.mxu0 0.0
        %944 = vmatpush1.msra.mxu0 0.0
        %945 = vmatprep.subr.mxu0 0.0
        %946 = vmatpush1.msra.mxu0 0.0
        %947 = vmatprep.subr.mxu0 0.0
        %948 = vmatpush1.msra.mxu0 0.0
        %949 = vmatprep.subr.mxu0 0.0
        %950 = vmatpush1.msra.mxu0 0.0
        %951 = vmatprep.subr.mxu0 0.0
        %952 = vmatpush1.msra.mxu0 %v895
        %953 = vmatprep.subr.mxu0 0.0
        %954 = vmatpush1.msra.mxu0 %v894
        %955 = vmatprep.subr.mxu0 0.0
        %956 = vmatpush1.msra.mxu0 %v893
        %957 = vmatprep.subr.mxu0 0.0
        %958 = vmatpush1.msra.mxu0 %v892
        %959 = vmatprep.subr.mxu0 0.0
        %960 = vmatpush2.msra.mxu0 0.0
        %961 = vmatprep.subr.mxu0 0.0
        %962 = vmatpush2.msra.mxu0 0.0
        %963 = vmatprep.subr.mxu0 0.0
        %964 = vmatpush2.msra.mxu0 0.0
        %965 = vmatprep.subr.mxu0 0.0
        %966 = vmatpush2.msra.mxu0 0.0
        %967 = vmatprep.subr.mxu0 0.0
        %968 = vmatpush2.msra.mxu0 0.0
        %969 = vmatprep.subr.mxu0 0.0
        %970 = vmatpush2.msra.mxu0 0.0
        %971 = vmatprep.subr.mxu0 0.0
        %972 = vmatpush2.msra.mxu0 0.0
        %973 = vmatprep.subr.mxu0 0.0
        %974 = vmatpush2.msra.mxu0 0.0
        %975 = vmatprep.subr.mxu0 0.0
        %976 = vmatpush2.msra.mxu0 0.0
        %977 = vmatprep.subr.mxu0 0.0
        %978 = vmatpush2.msra.mxu0 0.0
        %979 = vmatprep.subr.mxu0 0.0
        %980 = vmatpush2.msra.mxu0 0.0
        %981 = vmatprep.subr.mxu0 0.0
        %982 = vmatpush2.msra.mxu0 0.0
        %983 = vmatprep.subr.mxu0 0.0
        %984 = vmatpush2.msra.mxu0 0.0
        %985 = vmatprep.subr.mxu0 0.0
        %986 = vmatpush2.msra.mxu0 0.0
        %987 = vmatprep.subr.mxu0 0.0
        %988 = vmatpush2.msra.mxu0 0.0
        %989 = vmatprep.subr.mxu0 0.0
        %990 = vmatpush2.msra.mxu0 0.0
        %991 = vmatprep.mubr.f32.mxu0 0.0
        %992 = vmatmul.mubr.f32.gmra.mxu0 %v904
        %v993 = vpop.f32.mrf.mxu0
        %v994 = vadd.f32 %v901, %v993
        %v995 = vpop.f32.mrf.mxu0
        %996 = vmatprep.mubr.f32.mxu0 0.0
        %997 = vmatmul.mubr.f32.gmra.mxu0 %v907
        %v998 = vpop.f32.mrf.mxu0
        %v999 = vadd.f32 %v901, %v998
        %v1000 = vpop.f32.mrf.mxu0
        %1001 = vmatprep.mubr.f32.mxu0 0.0
        %1002 = vmatmul.mubr.f32.gmra.mxu0 %v910
        %v1003 = vpop.f32.mrf.mxu0
        %v1004 = vadd.f32 %v901, %v1003
        %v1005 = vpop.f32.mrf.mxu0
        %1006 = vmatprep.mubr.f32.mxu0 0.0
        %1007 = vmatmul.mubr.f32.gmra.mxu0 %v913
        %v1008 = vpop.f32.mrf.mxu0
        %v1009 = vadd.f32 %v901, %v1008
        %v1010 = vpop.f32.mrf.mxu0
        %1011 = vmatprep.mubr.f32.mxu0 0.0
        %1012 = vmatmul.mubr.f32.gmra.mxu0 %v916
        %v1013 = vpop.f32.mrf.mxu0
        %v1014 = vadd.f32 %v901, %v1013
        %v1015 = vpop.f32.mrf.mxu0
        %1016 = vmatprep.mubr.f32.mxu0 0.0
        %1017 = vmatmul.mubr.f32.gmra.mxu0 %v919
        %v1018 = vpop.f32.mrf.mxu0
        %v1019 = vadd.f32 %v901, %v1018
        %v1020 = vpop.f32.mrf.mxu0
        %1021 = vmatprep.mubr.f32.mxu0 0.0
        %1022 = vmatmul.mubr.f32.gmra.mxu0 %v922
        %v1023 = vpop.f32.mrf.mxu0
        %v1024 = vadd.f32 %v901, %v1023
        %v1025 = vpop.f32.mrf.mxu0
        %1026 = vmatprep.mubr.f32.mxu0 0.0
        %1027 = vmatmul.mubr.f32.gmra.mxu0 %v925
        %v1028 = vpop.f32.mrf.mxu0
        %v1029 = vadd.f32 %v901, %v1028
        %v1030 = vpop.f32.mrf.mxu0
        %1031 = vdwg.mxu0
        %v1032 = vmax.f32 %v994, 0.0
        %v1033 = vmax.f32 %v999, 0.0
        %v1034 = vmax.f32 %v1004, 0.0
        %v1035 = vmax.f32 %v1009, 0.0
        %v1036 = vmax.f32 %v1014, 0.0
        %v1037 = vmax.f32 %v1019, 0.0
        %v1038 = vmax.f32 %v1024, 0.0
        %v1039 = vmax.f32 %v1029, 0.0
        %v1040 = vld [vmem:[%s8] sm:$0xff]
        %v1041 = vld [vmem:[%s8 + $0x8] sm:$0xff]
        %v1042 = vld [vmem:[%s8 + $0x10] sm:$0xff]
        %v1043 = vld [vmem:[%s8 + $0x18] sm:$0xff]
        %v1044 = vld [vmem:[%s8 + $0x20] sm:$0xff]
        %v1045 = vld [vmem:[%s8 + $0x28] sm:$0xff]
        %v1046 = vld [vmem:[%s8 + $0x30] sm:$0xff]
        %v1047 = vld [vmem:[%s8 + $0x38] sm:$0xff]
        %v1048 = vld [vmem:[%s8 + $0x40] sm:$0xff]
        %v1049 = vld [vmem:[%s8 + $0x48] sm:$0xff]
        %v1050 = vld [vmem:[%s9] sm:$0x1]
        %v1052 = vlaneseq
        %v1053 = vshrl.u32 %v1052, 7
        %v1054 = vsub.s32 0, %v1053
        %v1055 = vrot.slane %v1050, %v1054
        %vm1057 = vcmask 654336
        %v1059 = vsel %vm1057, %v1032, 0
        %v1062 = vsel %vm1057, %v1033, 0
        %v1065 = vsel %vm1057, %v1034, 0
        %v1068 = vsel %vm1057, %v1035, 0
        %v1071 = vsel %vm1057, %v1036, 0
        %v1074 = vsel %vm1057, %v1037, 0
        %v1077 = vsel %vm1057, %v1038, 0
        %v1080 = vsel %vm1057, %v1039, 0
        %1082 = vmatprep.subr.mxu0 0.0
        %1083 = vmatpush1.msra.mxu0 0.0
        %1084 = vmatprep.subr.mxu0 0.0
        %1085 = vmatpush1.msra.mxu0 0.0
        %1086 = vmatprep.subr.mxu0 0.0
        %1087 = vmatpush1.msra.mxu0 0.0
        %1088 = vmatprep.subr.mxu0 0.0
        %1089 = vmatpush1.msra.mxu0 0.0
        %1090 = vmatprep.subr.mxu0 0.0
        %1091 = vmatpush1.msra.mxu0 0.0
        %1092 = vmatprep.subr.mxu0 0.0
        %1093 = vmatpush1.msra.mxu0 0.0
        %1094 = vmatprep.subr.mxu0 0.0
        %1095 = vmatpush1.msra.mxu0 %v1049
        %1096 = vmatprep.subr.mxu0 0.0
        %1097 = vmatpush1.msra.mxu0 %v1048
        %1098 = vmatprep.subr.mxu0 0.0
        %1099 = vmatpush1.msra.mxu0 %v1047
        %1100 = vmatprep.subr.mxu0 0.0
        %1101 = vmatpush1.msra.mxu0 %v1046
        %1102 = vmatprep.subr.mxu0 0.0
        %1103 = vmatpush1.msra.mxu0 %v1045
        %1104 = vmatprep.subr.mxu0 0.0
        %1105 = vmatpush1.msra.mxu0 %v1044
        %1106 = vmatprep.subr.mxu0 0.0
        %1107 = vmatpush1.msra.mxu0 %v1043
        %1108 = vmatprep.subr.mxu0 0.0
        %1109 = vmatpush1.msra.mxu0 %v1042
        %1110 = vmatprep.subr.mxu0 0.0
        %1111 = vmatpush1.msra.mxu0 %v1041
        %1112 = vmatprep.subr.mxu0 0.0
        %1113 = vmatpush1.msra.mxu0 %v1040
        %1114 = vmatprep.subr.mxu0 0.0
        %1115 = vmatpush2.msra.mxu0 0.0
        %1116 = vmatprep.subr.mxu0 0.0
        %1117 = vmatpush2.msra.mxu0 0.0
        %1118 = vmatprep.subr.mxu0 0.0
        %1119 = vmatpush2.msra.mxu0 0.0
        %1120 = vmatprep.subr.mxu0 0.0
        %1121 = vmatpush2.msra.mxu0 0.0
        %1122 = vmatprep.subr.mxu0 0.0
        %1123 = vmatpush2.msra.mxu0 0.0
        %1124 = vmatprep.subr.mxu0 0.0
        %1125 = vmatpush2.msra.mxu0 0.0
        %1126 = vmatprep.subr.mxu0 0.0
        %1127 = vmatpush2.msra.mxu0 0.0
        %1128 = vmatprep.subr.mxu0 0.0
        %1129 = vmatpush2.msra.mxu0 0.0
        %1130 = vmatprep.subr.mxu0 0.0
        %1131 = vmatpush2.msra.mxu0 0.0
        %1132 = vmatprep.subr.mxu0 0.0
        %1133 = vmatpush2.msra.mxu0 0.0
        %1134 = vmatprep.subr.mxu0 0.0
        %1135 = vmatpush2.msra.mxu0 0.0
        %1136 = vmatprep.subr.mxu0 0.0
        %1137 = vmatpush2.msra.mxu0 0.0
        %1138 = vmatprep.subr.mxu0 0.0
        %1139 = vmatpush2.msra.mxu0 0.0
        %1140 = vmatprep.subr.mxu0 0.0
        %1141 = vmatpush2.msra.mxu0 0.0
        %1142 = vmatprep.subr.mxu0 0.0
        %1143 = vmatpush2.msra.mxu0 0.0
        %1144 = vmatprep.subr.mxu0 0.0
        %1145 = vmatpush2.msra.mxu0 0.0
        %1146 = vmatprep.mubr.f32.mxu0 0.0
        %1147 = vmatmul.mubr.f32.gmra.mxu0 %v1059
        %v1148 = vpop.f32.mrf.mxu0
        %v1149 = vadd.f32 %v1055, %v1148
        %v1150 = vpop.f32.mrf.mxu0
        %1151 = vmatprep.mubr.f32.mxu0 0.0
        %1152 = vmatmul.mubr.f32.gmra.mxu0 %v1062
        %v1153 = vpop.f32.mrf.mxu0
        %v1154 = vadd.f32 %v1055, %v1153
        %v1155 = vpop.f32.mrf.mxu0
        %1156 = vmatprep.mubr.f32.mxu0 0.0
        %1157 = vmatmul.mubr.f32.gmra.mxu0 %v1065
        %v1158 = vpop.f32.mrf.mxu0
        %v1159 = vadd.f32 %v1055, %v1158
        %v1160 = vpop.f32.mrf.mxu0
        %1161 = vmatprep.mubr.f32.mxu0 0.0
        %1162 = vmatmul.mubr.f32.gmra.mxu0 %v1068
        %v1163 = vpop.f32.mrf.mxu0
        %v1164 = vadd.f32 %v1055, %v1163
        %v1165 = vpop.f32.mrf.mxu0
        %1166 = vmatprep.mubr.f32.mxu0 0.0
        %1167 = vmatmul.mubr.f32.gmra.mxu0 %v1071
        %v1168 = vpop.f32.mrf.mxu0
        %v1169 = vadd.f32 %v1055, %v1168
        %v1170 = vpop.f32.mrf.mxu0
        %1171 = vmatprep.mubr.f32.mxu0 0.0
        %1172 = vmatmul.mubr.f32.gmra.mxu0 %v1074
        %v1173 = vpop.f32.mrf.mxu0
        %v1174 = vadd.f32 %v1055, %v1173
        %v1175 = vpop.f32.mrf.mxu0
        %1176 = vmatprep.mubr.f32.mxu0 0.0
        %1177 = vmatmul.mubr.f32.gmra.mxu0 %v1077
        %v1178 = vpop.f32.mrf.mxu0
        %v1179 = vadd.f32 %v1055, %v1178
        %v1180 = vpop.f32.mrf.mxu0
        %1181 = vmatprep.mubr.f32.mxu0 0.0
        %1182 = vmatmul.mubr.f32.gmra.mxu0 %v1080
        %v1183 = vpop.f32.mrf.mxu0
        %v1184 = vadd.f32 %v1055, %v1183
        %v1185 = vpop.f32.mrf.mxu0
        %1186 = vdwg.mxu0
        %v1187 = vmax.f32 %v1149, 0.0
        %v1188 = vmax.f32 %v1154, 0.0
        %v1189 = vmax.f32 %v1159, 0.0
        %v1190 = vmax.f32 %v1164, 0.0
        %v1191 = vmax.f32 %v1169, 0.0
        %v1192 = vmax.f32 %v1174, 0.0
        %v1193 = vmax.f32 %v1179, 0.0
        %v1194 = vmax.f32 %v1184, 0.0
        %v1195 = vsub.f32 %v884, %v1187
        %v1196 = vsub.f32 %v885, %v1188
        %v1197 = vsub.f32 %v886, %v1189
        %v1198 = vsub.f32 %v887, %v1190
        %v1199 = vsub.f32 %v888, %v1191
        %v1200 = vsub.f32 %v889, %v1192
        %v1201 = vsub.f32 %v890, %v1193
        %v1202 = vsub.f32 %v891, %v1194
        %v1203 = vld [vmem:[#allocation7] sm:$0xff]
        %v1204 = vld [vmem:[#allocation7 + $0x8] sm:$0xff]
        %v1205 = vld [vmem:[#allocation7 + $0x10] sm:$0xff]
        %v1206 = vld [vmem:[#allocation7 + $0x18] sm:$0xff]
        %v1207 = vld [vmem:[%s11] sm:$0x1]
        %v1209 = vlaneseq
        %v1210 = vshrl.u32 %v1209, 7
        %v1211 = vsub.s32 0, %v1210
        %v1212 = vrot.slane %v1207, %v1211
        %v1215 = vsel %vm604, %v1195, 0
        %v1218 = vsel %vm604, %v1196, 0
        %v1221 = vsel %vm604, %v1197, 0
        %v1224 = vsel %vm604, %v1198, 0
        %v1227 = vsel %vm604, %v1199, 0
        %v1230 = vsel %vm604, %v1200, 0
        %v1233 = vsel %vm604, %v1201, 0
        %v1236 = vsel %vm604, %v1202, 0
        %1238 = vmatprep.subr.mxu0 0.0
        %1239 = vmatpush1.msra.mxu0 0.0
        %1240 = vmatprep.subr.mxu0 0.0
        %1241 = vmatpush1.msra.mxu0 0.0
        %1242 = vmatprep.subr.mxu0 0.0
        %1243 = vmatpush1.msra.mxu0 0.0
        %1244 = vmatprep.subr.mxu0 0.0
        %1245 = vmatpush1.msra.mxu0 0.0
        %1246 = vmatprep.subr.mxu0 0.0
        %1247 = vmatpush1.msra.mxu0 0.0
        %1248 = vmatprep.subr.mxu0 0.0
        %1249 = vmatpush1.msra.mxu0 0.0
        %1250 = vmatprep.subr.mxu0 0.0
        %1251 = vmatpush1.msra.mxu0 0.0
        %1252 = vmatprep.subr.mxu0 0.0
        %1253 = vmatpush1.msra.mxu0 0.0
        %1254 = vmatprep.subr.mxu0 0.0
        %1255 = vmatpush1.msra.mxu0 0.0
        %1256 = vmatprep.subr.mxu0 0.0
        %1257 = vmatpush1.msra.mxu0 0.0
        %1258 = vmatprep.subr.mxu0 0.0
        %1259 = vmatpush1.msra.mxu0 0.0
        %1260 = vmatprep.subr.mxu0 0.0
        %1261 = vmatpush1.msra.mxu0 0.0
        %1262 = vmatprep.subr.mxu0 0.0
        %1263 = vmatpush1.msra.mxu0 %v1206
        %1264 = vmatprep.subr.mxu0 0.0
        %1265 = vmatpush1.msra.mxu0 %v1205
        %1266 = vmatprep.subr.mxu0 0.0
        %1267 = vmatpush1.msra.mxu0 %v1204
        %1268 = vmatprep.subr.mxu0 0.0
        %1269 = vmatpush1.msra.mxu0 %v1203
        %1270 = vmatprep.subr.mxu0 0.0
        %1271 = vmatpush2.msra.mxu0 0.0
        %1272 = vmatprep.subr.mxu0 0.0
        %1273 = vmatpush2.msra.mxu0 0.0
        %1274 = vmatprep.subr.mxu0 0.0
        %1275 = vmatpush2.msra.mxu0 0.0
        %1276 = vmatprep.subr.mxu0 0.0
        %1277 = vmatpush2.msra.mxu0 0.0
        %1278 = vmatprep.subr.mxu0 0.0
        %1279 = vmatpush2.msra.mxu0 0.0
        %1280 = vmatprep.subr.mxu0 0.0
        %1281 = vmatpush2.msra.mxu0 0.0
        %1282 = vmatprep.subr.mxu0 0.0
        %1283 = vmatpush2.msra.mxu0 0.0
        %1284 = vmatprep.subr.mxu0 0.0
        %1285 = vmatpush2.msra.mxu0 0.0
        %1286 = vmatprep.subr.mxu0 0.0
        %1287 = vmatpush2.msra.mxu0 0.0
        %1288 = vmatprep.subr.mxu0 0.0
        %1289 = vmatpush2.msra.mxu0 0.0
        %1290 = vmatprep.subr.mxu0 0.0
        %1291 = vmatpush2.msra.mxu0 0.0
        %1292 = vmatprep.subr.mxu0 0.0
        %1293 = vmatpush2.msra.mxu0 0.0
        %1294 = vmatprep.subr.mxu0 0.0
        %1295 = vmatpush2.msra.mxu0 0.0
        %1296 = vmatprep.subr.mxu0 0.0
        %1297 = vmatpush2.msra.mxu0 0.0
        %1298 = vmatprep.subr.mxu0 0.0
        %1299 = vmatpush2.msra.mxu0 0.0
        %1300 = vmatprep.subr.mxu0 0.0
        %1301 = vmatpush2.msra.mxu0 0.0
        %1302 = vmatprep.mubr.f32.mxu0 0.0
        %1303 = vmatmul.mubr.f32.gmra.mxu0 %v1215
        %v1304 = vpop.f32.mrf.mxu0
        %v1305 = vadd.f32 %v1212, %v1304
        %v1306 = vpop.f32.mrf.mxu0
        %1307 = vmatprep.mubr.f32.mxu0 0.0
        %1308 = vmatmul.mubr.f32.gmra.mxu0 %v1218
        %v1309 = vpop.f32.mrf.mxu0
        %v1310 = vadd.f32 %v1212, %v1309
        %v1311 = vpop.f32.mrf.mxu0
        %1312 = vmatprep.mubr.f32.mxu0 0.0
        %1313 = vmatmul.mubr.f32.gmra.mxu0 %v1221
        %v1314 = vpop.f32.mrf.mxu0
        %v1315 = vadd.f32 %v1212, %v1314
        %v1316 = vpop.f32.mrf.mxu0
        %1317 = vmatprep.mubr.f32.mxu0 0.0
        %1318 = vmatmul.mubr.f32.gmra.mxu0 %v1224
        %v1319 = vpop.f32.mrf.mxu0
        %v1320 = vadd.f32 %v1212, %v1319
        %v1321 = vpop.f32.mrf.mxu0
        %1322 = vmatprep.mubr.f32.mxu0 0.0
        %1323 = vmatmul.mubr.f32.gmra.mxu0 %v1227
        %v1324 = vpop.f32.mrf.mxu0
        %v1325 = vadd.f32 %v1212, %v1324
        %v1326 = vpop.f32.mrf.mxu0
        %1327 = vmatprep.mubr.f32.mxu0 0.0
        %1328 = vmatmul.mubr.f32.gmra.mxu0 %v1230
        %v1329 = vpop.f32.mrf.mxu0
        %v1330 = vadd.f32 %v1212, %v1329
        %v1331 = vpop.f32.mrf.mxu0
        %1332 = vmatprep.mubr.f32.mxu0 0.0
        %1333 = vmatmul.mubr.f32.gmra.mxu0 %v1233
        %v1334 = vpop.f32.mrf.mxu0
        %v1335 = vadd.f32 %v1212, %v1334
        %v1336 = vpop.f32.mrf.mxu0
        %1337 = vmatprep.mubr.f32.mxu0 0.0
        %1338 = vmatmul.mubr.f32.gmra.mxu0 %v1236
        %v1339 = vpop.f32.mrf.mxu0
        %v1340 = vadd.f32 %v1212, %v1339
        %v1341 = vpop.f32.mrf.mxu0
        %1342 = vdwg.mxu0
        %v1343 = vmax.f32 %v1305, 0.0
        %v1344 = vmax.f32 %v1310, 0.0
        %v1345 = vmax.f32 %v1315, 0.0
        %v1346 = vmax.f32 %v1320, 0.0
        %v1347 = vmax.f32 %v1325, 0.0
        %v1348 = vmax.f32 %v1330, 0.0
        %v1349 = vmax.f32 %v1335, 0.0
        %v1350 = vmax.f32 %v1340, 0.0
        %v1351 = vld [vmem:[%s12] sm:$0xff]
        %v1352 = vld [vmem:[%s12 + $0x8] sm:$0xff]
        %v1353 = vld [vmem:[%s12 + $0x10] sm:$0xff]
        %v1354 = vld [vmem:[%s12 + $0x18] sm:$0xff]
        %v1355 = vld [vmem:[%s12 + $0x20] sm:$0xff]
        %v1356 = vld [vmem:[%s13] sm:$0x1]
        %v1358 = vlaneseq
        %v1359 = vshrl.u32 %v1358, 7
        %v1360 = vsub.s32 0, %v1359
        %v1361 = vrot.slane %v1356, %v1360
        %v1364 = vsel %vm754, %v1343, 0
        %v1367 = vsel %vm754, %v1344, 0
        %v1370 = vsel %vm754, %v1345, 0
        %v1373 = vsel %vm754, %v1346, 0
        %v1376 = vsel %vm754, %v1347, 0
        %v1379 = vsel %vm754, %v1348, 0
        %v1382 = vsel %vm754, %v1349, 0
        %v1385 = vsel %vm754, %v1350, 0
        %1387 = vmatprep.subr.mxu0 0.0
        %1388 = vmatpush1.msra.mxu0 0.0
        %1389 = vmatprep.subr.mxu0 0.0
        %1390 = vmatpush1.msra.mxu0 0.0
        %1391 = vmatprep.subr.mxu0 0.0
        %1392 = vmatpush1.msra.mxu0 0.0
        %1393 = vmatprep.subr.mxu0 0.0
        %1394 = vmatpush1.msra.mxu0 0.0
        %1395 = vmatprep.subr.mxu0 0.0
        %1396 = vmatpush1.msra.mxu0 0.0
        %1397 = vmatprep.subr.mxu0 0.0
        %1398 = vmatpush1.msra.mxu0 0.0
        %1399 = vmatprep.subr.mxu0 0.0
        %1400 = vmatpush1.msra.mxu0 0.0
        %1401 = vmatprep.subr.mxu0 0.0
        %1402 = vmatpush1.msra.mxu0 0.0
        %1403 = vmatprep.subr.mxu0 0.0
        %1404 = vmatpush1.msra.mxu0 0.0
        %1405 = vmatprep.subr.mxu0 0.0
        %1406 = vmatpush1.msra.mxu0 0.0
        %1407 = vmatprep.subr.mxu0 0.0
        %1408 = vmatpush1.msra.mxu0 0.0
        %1409 = vmatprep.subr.mxu0 0.0
        %1410 = vmatpush1.msra.mxu0 %v1355
        %1411 = vmatprep.subr.mxu0 0.0
        %1412 = vmatpush1.msra.mxu0 %v1354
        %1413 = vmatprep.subr.mxu0 0.0
        %1414 = vmatpush1.msra.mxu0 %v1353
        %1415 = vmatprep.subr.mxu0 0.0
        %1416 = vmatpush1.msra.mxu0 %v1352
        %1417 = vmatprep.subr.mxu0 0.0
        %1418 = vmatpush1.msra.mxu0 %v1351
        %1419 = vmatprep.subr.mxu0 0.0
        %1420 = vmatpush2.msra.mxu0 0.0
        %1421 = vmatprep.subr.mxu0 0.0
        %1422 = vmatpush2.msra.mxu0 0.0
        %1423 = vmatprep.subr.mxu0 0.0
        %1424 = vmatpush2.msra.mxu0 0.0
        %1425 = vmatprep.subr.mxu0 0.0
        %1426 = vmatpush2.msra.mxu0 0.0
        %1427 = vmatprep.subr.mxu0 0.0
        %1428 = vmatpush2.msra.mxu0 0.0
        %1429 = vmatprep.subr.mxu0 0.0
        %1430 = vmatpush2.msra.mxu0 0.0
        %1431 = vmatprep.subr.mxu0 0.0
        %1432 = vmatpush2.msra.mxu0 0.0
        %1433 = vmatprep.subr.mxu0 0.0
        %1434 = vmatpush2.msra.mxu0 0.0
        %1435 = vmatprep.subr.mxu0 0.0
        %1436 = vmatpush2.msra.mxu0 0.0
        %1437 = vmatprep.subr.mxu0 0.0
        %1438 = vmatpush2.msra.mxu0 0.0
        %1439 = vmatprep.subr.mxu0 0.0
        %1440 = vmatpush2.msra.mxu0 0.0
        %1441 = vmatprep.subr.mxu0 0.0
        %1442 = vmatpush2.msra.mxu0 0.0
        %1443 = vmatprep.subr.mxu0 0.0
        %1444 = vmatpush2.msra.mxu0 0.0
        %1445 = vmatprep.subr.mxu0 0.0
        %1446 = vmatpush2.msra.mxu0 0.0
        %1447 = vmatprep.subr.mxu0 0.0
        %1448 = vmatpush2.msra.mxu0 0.0
        %1449 = vmatprep.subr.mxu0 0.0
        %1450 = vmatpush2.msra.mxu0 0.0
        %1451 = vmatprep.mubr.f32.mxu0 0.0
        %1452 = vmatmul.mubr.f32.gmra.mxu0 %v1364
        %v1453 = vpop.f32.mrf.mxu0
        %v1454 = vadd.f32 %v1361, %v1453
        %v1455 = vpop.f32.mrf.mxu0
        %1456 = vmatprep.mubr.f32.mxu0 0.0
        %1457 = vmatmul.mubr.f32.gmra.mxu0 %v1367
        %v1458 = vpop.f32.mrf.mxu0
        %v1459 = vadd.f32 %v1361, %v1458
        %v1460 = vpop.f32.mrf.mxu0
        %1461 = vmatprep.mubr.f32.mxu0 0.0
        %1462 = vmatmul.mubr.f32.gmra.mxu0 %v1370
        %v1463 = vpop.f32.mrf.mxu0
        %v1464 = vadd.f32 %v1361, %v1463
        %v1465 = vpop.f32.mrf.mxu0
        %1466 = vmatprep.mubr.f32.mxu0 0.0
        %1467 = vmatmul.mubr.f32.gmra.mxu0 %v1373
        %v1468 = vpop.f32.mrf.mxu0
        %v1469 = vadd.f32 %v1361, %v1468
        %v1470 = vpop.f32.mrf.mxu0
        %1471 = vmatprep.mubr.f32.mxu0 0.0
        %1472 = vmatmul.mubr.f32.gmra.mxu0 %v1376
        %v1473 = vpop.f32.mrf.mxu0
        %v1474 = vadd.f32 %v1361, %v1473
        %v1475 = vpop.f32.mrf.mxu0
        %1476 = vmatprep.mubr.f32.mxu0 0.0
        %1477 = vmatmul.mubr.f32.gmra.mxu0 %v1379
        %v1478 = vpop.f32.mrf.mxu0
        %v1479 = vadd.f32 %v1361, %v1478
        %v1480 = vpop.f32.mrf.mxu0
        %1481 = vmatprep.mubr.f32.mxu0 0.0
        %1482 = vmatmul.mubr.f32.gmra.mxu0 %v1382
        %v1483 = vpop.f32.mrf.mxu0
        %v1484 = vadd.f32 %v1361, %v1483
        %v1485 = vpop.f32.mrf.mxu0
        %1486 = vmatprep.mubr.f32.mxu0 0.0
        %1487 = vmatmul.mubr.f32.gmra.mxu0 %v1385
        %v1488 = vpop.f32.mrf.mxu0
        %v1489 = vadd.f32 %v1361, %v1488
        %v1490 = vpop.f32.mrf.mxu0
        %1491 = vdwg.mxu0
        %v1492 = vmax.f32 %v1454, 0.0
        %v1493 = vmax.f32 %v1459, 0.0
        %v1494 = vmax.f32 %v1464, 0.0
        %v1495 = vmax.f32 %v1469, 0.0
        %v1496 = vmax.f32 %v1474, 0.0
        %v1497 = vmax.f32 %v1479, 0.0
        %v1498 = vmax.f32 %v1484, 0.0
        %v1499 = vmax.f32 %v1489, 0.0
        %v1500 = vsel %vm604, %v1492, -inf
        %1501 = vmax.xlane.f32.xlu0 %v1500
        %v1502 = vpop.xlane.xlu0 %1501
        %v1503 = vsel %vm604, %v1493, -inf
        %1504 = vmax.xlane.f32.xlu0 %v1503
        %v1505 = vpop.xlane.xlu0 %1504
        %v1506 = vsel %vm604, %v1494, -inf
        %1507 = vmax.xlane.f32.xlu0 %v1506
        %v1508 = vpop.xlane.xlu0 %1507
        %v1509 = vsel %vm604, %v1495, -inf
        %1510 = vmax.xlane.f32.xlu0 %v1509
        %v1511 = vpop.xlane.xlu0 %1510
        %v1512 = vsel %vm604, %v1496, -inf
        %1513 = vmax.xlane.f32.xlu0 %v1512
        %v1514 = vpop.xlane.xlu0 %1513
        %v1515 = vsel %vm604, %v1497, -inf
        %1516 = vmax.xlane.f32.xlu0 %v1515
        %v1517 = vpop.xlane.xlu0 %1516
        %v1518 = vsel %vm604, %v1498, -inf
        %1519 = vmax.xlane.f32.xlu0 %v1518
        %v1520 = vpop.xlane.xlu0 %1519
        %v1521 = vsel %vm604, %v1499, -inf
        %1522 = vmax.xlane.f32.xlu0 %v1521
        %v1523 = vpop.xlane.xlu0 %1522
        %v1524 = vsub.f32 %v1492, %v1502
        %v1525 = vsub.f32 %v1493, %v1505
        %v1526 = vsub.f32 %v1494, %v1508
        %v1527 = vsub.f32 %v1495, %v1511
        %v1528 = vsub.f32 %v1496, %v1514
        %v1529 = vsub.f32 %v1497, %v1517
        %v1530 = vsub.f32 %v1498, %v1520
        %v1531 = vsub.f32 %v1499, %v1523
        %v1532 = vmul.f32 %v1524, 1.442695
        %v1533 = vpow.pop %v1532
        %v1534 = vmul.f32 %v1525, 1.442695
        %v1535 = vpow.pop %v1534
        %v1536 = vmul.f32 %v1526, 1.442695
        %v1537 = vpow.pop %v1536
        %v1538 = vmul.f32 %v1527, 1.442695
        %v1539 = vpow.pop %v1538
        %v1540 = vmul.f32 %v1528, 1.442695
        %v1541 = vpow.pop %v1540
        %v1542 = vmul.f32 %v1529, 1.442695
        %v1543 = vpow.pop %v1542
        %v1544 = vmul.f32 %v1530, 1.442695
        %v1545 = vpow.pop %v1544
        %v1546 = vmul.f32 %v1531, 1.442695
        %v1547 = vpow.pop %v1546
        %v1548 = vsel %vm604, %v1533, 0.0
        %1549 = vadd.xlane.f32.xlu0 %v1548
        %v1550 = vpop.xlane.xlu0 %1549
        %v1551 = vsel %vm604, %v1535, 0.0
        %1552 = vadd.xlane.f32.xlu0 %v1551
        %v1553 = vpop.xlane.xlu0 %1552
        %v1554 = vsel %vm604, %v1537, 0.0
        %1555 = vadd.xlane.f32.xlu0 %v1554
        %v1556 = vpop.xlane.xlu0 %1555
        %v1557 = vsel %vm604, %v1539, 0.0
        %1558 = vadd.xlane.f32.xlu0 %v1557
        %v1559 = vpop.xlane.xlu0 %1558
        %v1560 = vsel %vm604, %v1541, 0.0
        %1561 = vadd.xlane.f32.xlu0 %v1560
        %v1562 = vpop.xlane.xlu0 %1561
        %v1563 = vsel %vm604, %v1543, 0.0
        %1564 = vadd.xlane.f32.xlu0 %v1563
        %v1565 = vpop.xlane.xlu0 %1564
        %v1566 = vsel %vm604, %v1545, 0.0
        %1567 = vadd.xlane.f32.xlu0 %v1566
        %v1568 = vpop.xlane.xlu0 %1567
        %v1569 = vsel %vm604, %v1547, 0.0
        %1570 = vadd.xlane.f32.xlu0 %v1569
        %v1571 = vpop.xlane.xlu0 %1570
        %v1572 = vrcp.pop %v1550
        %v1573 = vmul.f32 %v1533, %v1572
        %v1574 = vrcp.pop %v1553
        %v1575 = vmul.f32 %v1535, %v1574
        %v1576 = vrcp.pop %v1556
        %v1577 = vmul.f32 %v1537, %v1576
        %v1578 = vrcp.pop %v1559
        %v1579 = vmul.f32 %v1539, %v1578
        %v1580 = vrcp.pop %v1562
        %v1581 = vmul.f32 %v1541, %v1580
        %v1582 = vrcp.pop %v1565
        %v1583 = vmul.f32 %v1543, %v1582
        %v1584 = vrcp.pop %v1568
        %v1585 = vmul.f32 %v1545, %v1584
        %v1586 = vrcp.pop %v1571
        %v1587 = vmul.f32 %v1547, %v1586
        %1596 = vrot.lane.b32.xlu0 %v1187, 96
        %v1597 = vpop.permute.xlu0 %1596
        %1598 = vrot.lane.b32.xlu0 %v1188, 96
        %v1599 = vpop.permute.xlu0 %1598
        %1600 = vrot.lane.b32.xlu0 %v1189, 96
        %v1601 = vpop.permute.xlu0 %1600
        %1602 = vrot.lane.b32.xlu0 %v1190, 96
        %v1603 = vpop.permute.xlu0 %1602
        %1604 = vrot.lane.b32.xlu0 %v1191, 96
        %v1605 = vpop.permute.xlu0 %1604
        %1606 = vrot.lane.b32.xlu0 %v1192, 96
        %v1607 = vpop.permute.xlu0 %1606
        %1608 = vrot.lane.b32.xlu0 %v1193, 96
        %v1609 = vpop.permute.xlu0 %1608
        %1610 = vrot.lane.b32.xlu0 %v1194, 96
        %v1611 = vpop.permute.xlu0 %1610
        %v1620 = vmul.f32 %v1573, %v1597
        %v1621 = vmul.f32 %v1575, %v1599
        %v1622 = vmul.f32 %v1577, %v1601
        %v1623 = vmul.f32 %v1579, %v1603
        %v1624 = vmul.f32 %v1581, %v1605
        %v1625 = vmul.f32 %v1583, %v1607
        %v1626 = vmul.f32 %v1585, %v1609
        %v1627 = vmul.f32 %v1587, %v1611
        %v1628 = vadd.f32 %v1620, %v1622
        %v1629 = vadd.f32 %v1621, %v1623
        %v1630 = vadd.f32 %v1628, %v1624
        %v1631 = vadd.f32 %v1629, %v1625
        %v1632 = vadd.f32 %v1630, %v1626
        %v1633 = vadd.f32 %v1631, %v1627
        %1634 = vst.msk [vmem:[%s555] sm:$0xff] %vm604, %v1632
        %1635 = vst.msk [vmem:[%s555 + $0x8] sm:$0xff] %vm604, %v1633
        %s1636 = sand.u32 %s360, 1
        %s1637 = scalar_lea.sflag [#allocation4], %s1636
        %s1638 = sand.u32 %s360, 1
        %s1639 = smul.addr %s1638, 16
        %s1640 = scalar_lea.vmem [#allocation8], %s1639
        // Predicated region
        $region89: #{tpu_custom_call.1} parent=75 // pred_check
          %p1641 = pneg %p370
        $region90: #{tpu_custom_call.1} parent=75 // pred_check_branch
          %1643 = sbr.rel (%p1641) target = $region92
        $region91: #{tpu_custom_call.1} parent=75 // pred_region
          %s1644 = smul.u32 2, %s35
          %s1646 = ssub.s32 256, 256
          %1647 = vsyncadd %s1637, %s1646
          %s1648 = smul.addr %s34, 2
          %s1649 = sadd.s32 %s1644, %s1648
          %s1650 = smul.addr %s1649, 128
          %s1651 = scalar_lea.hbm %s14, %s1650
          %s1652 = sshll.u32 %s1640, 4
          %s1653 = int_to_ptr.vmem [resolvable:$true] %s1652
          %1658 = dma.vmem_to_hbm [thread:$0]  %s1653, 256, %s1651, %s1637, 128, 128, 8
        $region92: #{tpu_custom_call.1} parent=75 // pred_fallthru
          _
      $region76: #{tpu_custom_call.1} parent=5 // pred_fallthru
        _
      %p1659 = scmp.le.s32.totalorder 2, %s25
      // Predicated region
      $region93: #{tpu_custom_call.1} parent=5 // pred_check
        %p1660 = pneg %p1659
      $region94: #{tpu_custom_call.1} parent=5 // pred_check_branch
        %1662 = sbr.rel (%p1660) target = $region96
      $region95: #{tpu_custom_call.1} parent=5 // pred_region
        %s1663 = ssub.s32 %s25, 2
        // Predicated region
        $region97: #{tpu_custom_call.1} parent=95 // pred_check
          %p1664 = pneg %p376
        $region98: #{tpu_custom_call.1} parent=95 // pred_check_branch
          %1666 = sbr.rel (%p1664) target = $region100
        $region99: #{tpu_custom_call.1} parent=95 // pred_region
          %s1667 = sand.u32 %s361, 1
          %s1668 = scalar_lea.sflag [#allocation4], %s1667
          %s1669 = sand.u32 %s361, 1
          %s1670 = smul.addr %s1669, 16
          %s1671 = scalar_lea.vmem [#allocation8], %s1670
          %1672 = dma.done %s1668, 256
        $region100: #{tpu_custom_call.1} parent=95 // pred_fallthru
          _
      $region96: #{tpu_custom_call.1} parent=5 // pred_fallthru
        _
    $region6: #{tpu_custom_call.1} parent=1 // loop_footer
      %s29 = sadd.s32 1, %s25
    $region7: #{tpu_custom_call.1} parent=1 // loop_footer_branch
      %24 = sbr.rel target = $region3
    $region8: #{tpu_custom_call.1} parent=1 // loop_exit
      _
    %1673 = vsyncpa [#allocation3], 1
    %s1674 = scalar_lea.sflag [#allocation3], 1
    %1675 = vsyncpa %s1674, 1
    %1676 = vsyncpa [#allocation6], 1
    %1677 = vsyncpa [#allocation4], 1
    %s1678 = scalar_lea.sflag [#allocation4], 1
    %1679 = vsyncpa %s1678, 1

</llo_original>
